<compile_context>
chip_gen: v7x
topology: tpu7x:2x2x1
jax: 0.10.0
libtpu: 0.0.40
codegen_flags: <defaults>
</compile_context>

<pallas_src>
import functools

import jax
import jax.numpy as jnp
from jax.experimental import pallas as pl
from jax.experimental.pallas import tpu as pltpu

VMEM_SPEC = pl.BlockSpec(memory_space=pltpu.MemorySpace.VMEM)


# ----------------------------------------------------------------------------
# Single fused Pallas kernel: full forward pass
# ----------------------------------------------------------------------------
def _st_transformer_kernel(x_ref, adj_ref,
                           e1w_ref, e1b_ref, e2w_ref, e2b_ref,
                           g1w_ref, g1b_ref, chw_ref, chb_ref,
                           g23w_ref, g23b_ref,
                           dw_ref, db_ref, clus_ref,
                           z_ref, mu_ref, logvar_ref, de_ref, q_ref, fx_ref,
                           *, alpha):
    x = x_ref[...]
    mask_f = adj_ref[...]                         # [N, N] float 0/1 adjacency
    # Additive score mask, computed ONCE and reused by all 4 attention layers.
    score_bias = (mask_f - 1.0) * 1e30            # 0 on edges, -1e30 otherwise

    def linear_elu(v, w_ref, b_ref):
        # BatchNorm already folded into (w, b); dropout is identity in eval.
        h = jnp.dot(v, w_ref[...], preferred_element_type=jnp.float32) + b_ref[...]
        # ELU(alpha=1): x if x > 0 else exp(x) - 1
        return jnp.where(h > 0, h, jnp.exp(jnp.minimum(h, 0.0)) - 1.0)

    def attend(q, k, v, skip, apply_relu):
        # 1/sqrt(C) already folded into Wq/bq at packing time.
        s = jnp.dot(q, k.T, preferred_element_type=jnp.float32) + score_bias
        m = jnp.max(s, axis=-1, keepdims=True)
        # mask multiply keeps PyG semantics for isolated nodes (skip-only out)
        e = jnp.exp(s - m) * mask_f
        denom = jnp.maximum(jnp.sum(e, axis=-1, keepdims=True), 1e-30)
        p = e * pl.reciprocal(denom, approx=True)
        out = jnp.dot(p, v, preferred_element_type=jnp.float32) + skip
        return jnp.maximum(out, 0.0) if apply_relu else out

    def tconv(v, w_ref, b_ref, apply_relu):
        # One lane-dense projection matmul -> slice q | k | v | skip.
        c = w_ref.shape[1] // 4
        proj = jnp.dot(v, w_ref[...], preferred_element_type=jnp.float32) + b_ref[...]
        return attend(proj[:, 0 * c:1 * c], proj[:, 1 * c:2 * c],
                      proj[:, 2 * c:3 * c], proj[:, 3 * c:4 * c], apply_relu)

    # ---- encoder --------------------------------------------------------
    feat = linear_elu(x, e1w_ref, e1b_ref)
    feat_x = linear_elu(feat, e2w_ref, e2b_ref)
    fx_ref[...] = feat_x

    # ---- graph attention stack (layer_num = 3 as in the module) ---------
    h = tconv(feat_x, g1w_ref, g1b_ref, True)     # gc1 + ReLU
    h = tconv(h, chw_ref, chb_ref, True)          # conv_hidden[0] + ReLU

    # ---- gc2 | gc3 fused: one shared [N, 8*gcn_h2] projection ------------
    c2 = g23w_ref.shape[1] // 8
    proj = jnp.dot(h, g23w_ref[...], preferred_element_type=jnp.float32) + g23b_ref[...]
    mu = attend(proj[:, 0 * c2:1 * c2], proj[:, 1 * c2:2 * c2],
                proj[:, 2 * c2:3 * c2], proj[:, 3 * c2:4 * c2], False)
    logvar = attend(proj[:, 4 * c2:5 * c2], proj[:, 5 * c2:6 * c2],
                    proj[:, 6 * c2:7 * c2], proj[:, 7 * c2:8 * c2], False)
    mu_ref[...] = mu
    logvar_ref[...] = logvar

    # ---- reparameterize (eval): gnn_z = mu; latent z ---------------------
    z = jnp.concatenate([feat_x, mu], axis=1)
    z_ref[...] = z

    # ---- decoder full_block ----------------------------------------------
    de_ref[...] = linear_elu(z, dw_ref, db_ref)

    # ---- Student-t soft assignment (DEC) ----------------------------------
    c = clus_ref[...]
    z2 = jnp.sum(z * z, axis=-1, keepdims=True)                  # [N, 1]
    csq = jnp.sum(c * c, axis=-1, keepdims=True).T               # [1, K]
    d = jnp.maximum(
        z2 + csq - 2.0 * jnp.dot(z, c.T, preferred_element_type=jnp.float32), 0.0)
    qv = 1.0 / (1.0 + d / alpha)
    if alpha != 1.0:  # static specialization: exponent is exactly 1 at alpha=1
        qv = qv ** ((alpha + 1.0) / 2.0)
    q_ref[...] = qv / jnp.sum(qv, axis=-1, keepdims=True)        # exact normalize


# ----------------------------------------------------------------------------
# pallas_call wrapper (whole model fits in VMEM at these sizes -> single block)
# ----------------------------------------------------------------------------
def st_transformer_forward(packed, x, adj, alpha=1.0):
    n = x.shape[0]
    feat_h2 = packed["e2w"].shape[1]
    gcn_h2 = packed["g23w"].shape[1] // 8
    input_dim = packed["dw"].shape[1]
    n_clusters = packed["clusters"].shape[0]
    latent = feat_h2 + gcn_h2

    kern = functools.partial(_st_transformer_kernel, alpha=float(alpha))
    out_shape = (
        jax.ShapeDtypeStruct((n, latent), jnp.float32),     # z
        jax.ShapeDtypeStruct((n, gcn_h2), jnp.float32),     # mu
        jax.ShapeDtypeStruct((n, gcn_h2), jnp.float32),     # logvar
        jax.ShapeDtypeStruct((n, input_dim), jnp.float32),  # de_feat
        jax.ShapeDtypeStruct((n, n_clusters), jnp.float32), # q
        jax.ShapeDtypeStruct((n, feat_h2), jnp.float32),    # feat_x
    )
    z, mu, logvar, de_feat, q, feat_x = pl.pallas_call(
        kern,
        out_shape=out_shape,
        in_specs=[VMEM_SPEC] * 15,
        out_specs=(VMEM_SPEC,) * 6,
    )(x, adj,
      packed["e1w"], packed["e1b"], packed["e2w"], packed["e2b"],
      packed["g1w"], packed["g1b"], packed["chw"], packed["chb"],
      packed["g23w"], packed["g23b"], packed["dw"], packed["db"],
      packed["clusters"])
    gnn_z = mu  # eval-mode reparameterization
    return z, mu, logvar, de_feat, q, feat_x, gnn_z


# ----------------------------------------------------------------------------
# Parameter construction (deterministic, synthetic) + packing / folding
# ----------------------------------------------------------------------------
def _glorot_uniform(key, shape):
    fan_in, fan_out = shape
    lim = jnp.sqrt(6.0 / (fan_in + fan_out))
    return jax.random.uniform(key, shape, jnp.float32, -lim, lim)


def _full_block_params(key, in_f, out_f):
    # Linear + fresh BatchNorm1d eval stats (gamma=1, beta=0, mean=0, var=1)
    return dict(w=_glorot_uniform(key, (in_f, out_f)),
                b=jnp.zeros((out_f,), jnp.float32),
                gamma=jnp.ones((out_f,), jnp.float32),
                beta=jnp.zeros((out_f,), jnp.float32),
                rmean=jnp.zeros((out_f,), jnp.float32),
                rvar=jnp.ones((out_f,), jnp.float32))


def _tconv_params(key, in_f, out_f):
    k = jax.random.split(key, 4)
    return dict(
        wq=_glorot_uniform(k[0], (in_f, out_f)), bq=jnp.zeros((out_f,), jnp.float32),
        wk=_glorot_uniform(k[1], (in_f, out_f)), bk=jnp.zeros((out_f,), jnp.float32),
        wv=_glorot_uniform(k[2], (in_f, out_f)), bv=jnp.zeros((out_f,), jnp.float32),
        ws=_glorot_uniform(k[3], (in_f, out_f)), bs=jnp.zeros((out_f,), jnp.float32),
    )


def _pack_full_block(p, bn_eps=1e-4):
    # Fold eval-mode BatchNorm into the Linear: y = (xW + b)*scale + shift
    scale = p["gamma"] / jnp.sqrt(p["rvar"] + bn_eps)
    shift = p["beta"] - p["rmean"] * scale
    w = p["w"] * scale[None, :]
    b = p["b"] * scale + shift
    return w, b.reshape(1, -1)


def _pack_tconv(p):
    # Concatenate Wq|Wk|Wv|Wskip (1/sqrt(C) folded into the query projection).
    c = p["wq"].shape[1]
    s = float(c) ** -0.5
    w = jnp.concatenate([p["wq"] * s, p["wk"], p["wv"], p["ws"]], axis=1)
    b = jnp.concatenate([p["bq"] * s, p["bk"], p["bv"], p["bs"]]).reshape(1, -1)
    return w, b


def init_st_transformer(key, input_dim, feat_hidden1, feat_hidden2,
                        gcn_hidden1, gcn_hidden2, dec_cluster_n):
    latent_dim = gcn_hidden2 + feat_hidden2
    ks = jax.random.split(key, 9)
    return dict(
        enc1=_full_block_params(ks[0], input_dim, feat_hidden1),
        enc2=_full_block_params(ks[1], feat_hidden1, feat_hidden2),
        dec0=_full_block_params(ks[2], latent_dim, input_dim),
        gc1=_tconv_params(ks[3], feat_hidden2, gcn_hidden1),
        conv_hidden=[_tconv_params(ks[4], gcn_hidden1, gcn_hidden1)],  # layer_num=3
        gc2=_tconv_params(ks[5], gcn_hidden1, gcn_hidden2),
        gc3=_tconv_params(ks[6], gcn_hidden1, gcn_hidden2),
        # xavier_normal_ on (dec_cluster_n, latent_dim)
        cluster_layer=jax.random.normal(ks[7], (dec_cluster_n, latent_dim),
                                        jnp.float32)
        * jnp.sqrt(2.0 / (dec_cluster_n + latent_dim)),
    )


def pack_params(params):
    e1w, e1b = _pack_full_block(params["enc1"])
    e2w, e2b = _pack_full_block(params["enc2"])
    dw, db = _pack_full_block(params["dec0"])
    g1w, g1b = _pack_tconv(params["gc1"])
    chw, chb = _pack_tconv(params["conv_hidden"][0])
    w2, b2 = _pack_tconv(params["gc2"])
    w3, b3 = _pack_tconv(params["gc3"])
    return dict(e1w=e1w, e1b=e1b, e2w=e2w, e2b=e2b,
                g1w=g1w, g1b=g1b, chw=chw, chb=chb,
                g23w=jnp.concatenate([w2, w3], axis=1),
                g23b=jnp.concatenate([b2, b3], axis=1),
                dw=dw, db=db, clusters=params["cluster_layer"])


# ----------------------------------------------------------------------------
if __name__ == "__main__":
    # Small, module-consistent sizes
    N = 16              # number of spots / graph nodes
    INPUT_DIM = 32
    FEAT_H1, FEAT_H2 = 64, 32
    GCN_H1, GCN_H2 = 32, 16
    DEC_CLUSTER_N = 8

    key = jax.random.PRNGKey(0)
    k_param, k_x, k_adj = jax.random.split(key, 3)

    raw = init_st_transformer(k_param, INPUT_DIM, FEAT_H1, FEAT_H2,
                              GCN_H1, GCN_H2, DEC_CLUSTER_N)
    packed = pack_params(raw)

    x = jax.random.normal(k_x, (N, INPUT_DIM), jnp.float32)
    # dense adjacency with self-loops (adj[i, j] = 1 -> edge j -> i)
    adj = (jax.random.uniform(k_adj, (N, N)) < 0.3).astype(jnp.float32)
    adj = jnp.maximum(adj, jnp.eye(N, dtype=jnp.float32))

    fwd = jax.jit(functools.partial(st_transformer_forward, alpha=1.0))
    outs = fwd(packed, x, adj)
    outs = jax.block_until_ready(outs)

    z, mu, logvar, de_feat, q, feat_x, gnn_z = outs
    assert z.shape == (N, FEAT_H2 + GCN_H2)
    assert mu.shape == (N, GCN_H2) and logvar.shape == (N, GCN_H2)
    assert de_feat.shape == (N, INPUT_DIM)
    assert q.shape == (N, DEC_CLUSTER_N)
    assert feat_x.shape == (N, FEAT_H2) and gnn_z.shape == (N, GCN_H2)
    assert bool(jnp.all(jnp.isfinite(q))) and bool(
        jnp.allclose(jnp.sum(q, axis=1), 1.0, atol=1e-5))

    print("KERNEL_OK")
</pallas_src>

<mosaic_0001>
module attributes {stable_mosaic.version = 11 : i64} {
  func.func @_st_transformer_kernel(%arg0: memref<16x32xf32, #tpu.memory_space<vmem>>, %arg1: memref<16x16xf32, #tpu.memory_space<vmem>>, %arg2: memref<32x64xf32, #tpu.memory_space<vmem>>, %arg3: memref<1x64xf32, #tpu.memory_space<vmem>>, %arg4: memref<64x32xf32, #tpu.memory_space<vmem>>, %arg5: memref<1x32xf32, #tpu.memory_space<vmem>>, %arg6: memref<32x128xf32, #tpu.memory_space<vmem>>, %arg7: memref<1x128xf32, #tpu.memory_space<vmem>>, %arg8: memref<32x128xf32, #tpu.memory_space<vmem>>, %arg9: memref<1x128xf32, #tpu.memory_space<vmem>>, %arg10: memref<32x128xf32, #tpu.memory_space<vmem>>, %arg11: memref<1x128xf32, #tpu.memory_space<vmem>>, %arg12: memref<48x32xf32, #tpu.memory_space<vmem>>, %arg13: memref<1x32xf32, #tpu.memory_space<vmem>>, %arg14: memref<8x48xf32, #tpu.memory_space<vmem>>, %arg15: memref<16x48xf32, #tpu.memory_space<vmem>>, %arg16: memref<16x16xf32, #tpu.memory_space<vmem>>, %arg17: memref<16x16xf32, #tpu.memory_space<vmem>>, %arg18: memref<16x32xf32, #tpu.memory_space<vmem>>, %arg19: memref<16x8xf32, #tpu.memory_space<vmem>>, %arg20: memref<16x32xf32, #tpu.memory_space<vmem>>) attributes {dimension_semantics = [], scalar_prefetch = 0 : i64, scratch_operands = 0 : i64, tpu.core_type = #tpu.core_type<tc>} {
    %c0 = arith.constant 0 : index
    %c0_0 = arith.constant 0 : index
    %0 = vector.load %arg0[%c0, %c0_0] : memref<16x32xf32, #tpu.memory_space<vmem>>, vector<16x32xf32>
    %c0_1 = arith.constant 0 : index
    %c0_2 = arith.constant 0 : index
    %1 = vector.load %arg1[%c0_1, %c0_2] : memref<16x16xf32, #tpu.memory_space<vmem>>, vector<16x16xf32>
    %cst = arith.constant 1.000000e+00 : f32
    %2 = vector.broadcast %cst : f32 to vector<16x16xf32>
    %3 = arith.subf %1, %2 : vector<16x16xf32>
    %cst_3 = arith.constant 1.000000e+30 : f32
    %4 = vector.broadcast %cst_3 : f32 to vector<16x16xf32>
    %5 = arith.mulf %3, %4 : vector<16x16xf32>
    %c0_4 = arith.constant 0 : index
    %c0_5 = arith.constant 0 : index
    %6 = vector.load %arg2[%c0_4, %c0_5] : memref<32x64xf32, #tpu.memory_space<vmem>>, vector<32x64xf32>
    %cst_6 = arith.constant dense<0.000000e+00> : vector<16x64xf32>
    %7 = tpu.matmul %0, %6, %cst_6 {dimension_numbers = #tpu.dot_dimension_numbers<[1], [0], [0], [1], [0, 0, 1, 1], [], []>} : vector<16x32xf32>, vector<32x64xf32>, vector<16x64xf32> -> vector<16x64xf32>
    %c0_7 = arith.constant 0 : index
    %c0_8 = arith.constant 0 : index
    %8 = vector.load %arg3[%c0_7, %c0_8] : memref<1x64xf32, #tpu.memory_space<vmem>>, vector<1x64xf32>
    %9 = vector.broadcast %8 : vector<1x64xf32> to vector<16x64xf32>
    %10 = arith.addf %7, %9 : vector<16x64xf32>
    %cst_9 = arith.constant 0.000000e+00 : f32
    %11 = vector.broadcast %cst_9 : f32 to vector<16x64xf32>
    %12 = arith.cmpf ogt, %10, %11 : vector<16x64xf32>
    %cst_10 = arith.constant 0.000000e+00 : f32
    %13 = vector.broadcast %cst_10 : f32 to vector<16x64xf32>
    %14 = arith.minimumf %10, %13 : vector<16x64xf32>
    %15 = math.exp %14 : vector<16x64xf32>
    %cst_11 = arith.constant 1.000000e+00 : f32
    %16 = vector.broadcast %cst_11 : f32 to vector<16x64xf32>
    %17 = arith.subf %15, %16 : vector<16x64xf32>
    %18 = arith.select %12, %10, %17 : vector<16x64xi1>, vector<16x64xf32>
    %c0_12 = arith.constant 0 : index
    %c0_13 = arith.constant 0 : index
    %19 = vector.load %arg4[%c0_12, %c0_13] : memref<64x32xf32, #tpu.memory_space<vmem>>, vector<64x32xf32>
    %cst_14 = arith.constant dense<0.000000e+00> : vector<16x32xf32>
    %20 = tpu.matmul %18, %19, %cst_14 {dimension_numbers = #tpu.dot_dimension_numbers<[1], [0], [0], [1], [0, 0, 1, 1], [], []>} : vector<16x64xf32>, vector<64x32xf32>, vector<16x32xf32> -> vector<16x32xf32>
    %c0_15 = arith.constant 0 : index
    %c0_16 = arith.constant 0 : index
    %21 = vector.load %arg5[%c0_15, %c0_16] : memref<1x32xf32, #tpu.memory_space<vmem>>, vector<1x32xf32>
    %22 = vector.broadcast %21 : vector<1x32xf32> to vector<16x32xf32>
    %23 = arith.addf %20, %22 : vector<16x32xf32>
    %cst_17 = arith.constant 0.000000e+00 : f32
    %24 = vector.broadcast %cst_17 : f32 to vector<16x32xf32>
    %25 = arith.cmpf ogt, %23, %24 : vector<16x32xf32>
    %cst_18 = arith.constant 0.000000e+00 : f32
    %26 = vector.broadcast %cst_18 : f32 to vector<16x32xf32>
    %27 = arith.minimumf %23, %26 : vector<16x32xf32>
    %28 = math.exp %27 : vector<16x32xf32>
    %cst_19 = arith.constant 1.000000e+00 : f32
    %29 = vector.broadcast %cst_19 : f32 to vector<16x32xf32>
    %30 = arith.subf %28, %29 : vector<16x32xf32>
    %31 = arith.select %25, %23, %30 : vector<16x32xi1>, vector<16x32xf32>
    %c0_20 = arith.constant 0 : index
    %c0_21 = arith.constant 0 : index
    %32 = vector.load %arg20[%c0_20, %c0_21] : memref<16x32xf32, #tpu.memory_space<vmem>>, vector<16x32xf32>
    tpu.vector_store %arg20[%c0_20, %c0_21], %31 {strides = array<i32>} : memref<16x32xf32, #tpu.memory_space<vmem>>, vector<16x32xf32>,
    %c0_22 = arith.constant 0 : index
    %c0_23 = arith.constant 0 : index
    %33 = vector.load %arg6[%c0_22, %c0_23] : memref<32x128xf32, #tpu.memory_space<vmem>>, vector<32x128xf32>
    %cst_24 = arith.constant dense<0.000000e+00> : vector<16x128xf32>
    %34 = tpu.matmul %31, %33, %cst_24 {dimension_numbers = #tpu.dot_dimension_numbers<[1], [0], [0], [1], [0, 0, 1, 1], [], []>} : vector<16x32xf32>, vector<32x128xf32>, vector<16x128xf32> -> vector<16x128xf32>
    %c0_25 = arith.constant 0 : index
    %c0_26 = arith.constant 0 : index
    %35 = vector.load %arg7[%c0_25, %c0_26] : memref<1x128xf32, #tpu.memory_space<vmem>>, vector<1x128xf32>
    %36 = vector.broadcast %35 : vector<1x128xf32> to vector<16x128xf32>
    %37 = arith.addf %34, %36 : vector<16x128xf32>
    %38 = vector.extract_strided_slice %37 {offsets = [0, 0], sizes = [16, 32], strides = [1, 1]} : vector<16x128xf32> to vector<16x32xf32>
    %39 = vector.extract_strided_slice %37 {offsets = [0, 32], sizes = [16, 32], strides = [1, 1]} : vector<16x128xf32> to vector<16x32xf32>
    %40 = vector.extract_strided_slice %37 {offsets = [0, 64], sizes = [16, 32], strides = [1, 1]} : vector<16x128xf32> to vector<16x32xf32>
    %41 = vector.extract_strided_slice %37 {offsets = [0, 96], sizes = [16, 32], strides = [1, 1]} : vector<16x128xf32> to vector<16x32xf32>
    %42 = tpu.transpose %39, [1, 0] : vector<16x32xf32> -> vector<32x16xf32>
    %cst_27 = arith.constant dense<0.000000e+00> : vector<16x16xf32>
    %43 = tpu.matmul %38, %42, %cst_27 {dimension_numbers = #tpu.dot_dimension_numbers<[1], [0], [0], [1], [0, 0, 1, 1], [], []>} : vector<16x32xf32>, vector<32x16xf32>, vector<16x16xf32> -> vector<16x16xf32>
    %44 = arith.addf %43, %5 : vector<16x16xf32>
    %cst_28 = arith.constant dense<0xFF800000> : vector<16xf32>
    %45 = vector.multi_reduction <maximumf>, %44, %cst_28 [1] : vector<16x16xf32> to vector<16xf32>
    %46 = vector.shape_cast %45 : vector<16xf32> to vector<16x1xf32>
    %47 = vector.broadcast %46 : vector<16x1xf32> to vector<16x16xf32>
    %48 = arith.subf %44, %47 : vector<16x16xf32>
    %49 = math.exp %48 : vector<16x16xf32>
    %50 = arith.mulf %49, %1 : vector<16x16xf32>
    %cst_29 = arith.constant dense<0.000000e+00> : vector<16xf32>
    %51 = vector.multi_reduction <add>, %50, %cst_29 [1] : vector<16x16xf32> to vector<16xf32>
    %52 = vector.shape_cast %51 : vector<16xf32> to vector<16x1xf32>
    %cst_30 = arith.constant 1.000000e-30 : f32
    %53 = vector.broadcast %cst_30 : f32 to vector<16x1xf32>
    %54 = arith.maximumf %52, %53 : vector<16x1xf32>
    %55 = tpu.reciprocal %54 {approx = true} : vector<16x1xf32> -> vector<16x1xf32>
    %56 = vector.broadcast %55 : vector<16x1xf32> to vector<16x16xf32>
    %57 = arith.mulf %50, %56 : vector<16x16xf32>
    %cst_31 = arith.constant dense<0.000000e+00> : vector<16x32xf32>
    %58 = tpu.matmul %57, %40, %cst_31 {dimension_numbers = #tpu.dot_dimension_numbers<[1], [0], [0], [1], [0, 0, 1, 1], [], []>} : vector<16x16xf32>, vector<16x32xf32>, vector<16x32xf32> -> vector<16x32xf32>
    %59 = arith.addf %58, %41 : vector<16x32xf32>
    %cst_32 = arith.constant 0.000000e+00 : f32
    %60 = vector.broadcast %cst_32 : f32 to vector<16x32xf32>
    %61 = arith.maximumf %59, %60 : vector<16x32xf32>
    %c0_33 = arith.constant 0 : index
    %c0_34 = arith.constant 0 : index
    %62 = vector.load %arg8[%c0_33, %c0_34] : memref<32x128xf32, #tpu.memory_space<vmem>>, vector<32x128xf32>
    %cst_35 = arith.constant dense<0.000000e+00> : vector<16x128xf32>
    %63 = tpu.matmul %61, %62, %cst_35 {dimension_numbers = #tpu.dot_dimension_numbers<[1], [0], [0], [1], [0, 0, 1, 1], [], []>} : vector<16x32xf32>, vector<32x128xf32>, vector<16x128xf32> -> vector<16x128xf32>
    %c0_36 = arith.constant 0 : index
    %c0_37 = arith.constant 0 : index
    %64 = vector.load %arg9[%c0_36, %c0_37] : memref<1x128xf32, #tpu.memory_space<vmem>>, vector<1x128xf32>
    %65 = vector.broadcast %64 : vector<1x128xf32> to vector<16x128xf32>
    %66 = arith.addf %63, %65 : vector<16x128xf32>
    %67 = vector.extract_strided_slice %66 {offsets = [0, 0], sizes = [16, 32], strides = [1, 1]} : vector<16x128xf32> to vector<16x32xf32>
    %68 = vector.extract_strided_slice %66 {offsets = [0, 32], sizes = [16, 32], strides = [1, 1]} : vector<16x128xf32> to vector<16x32xf32>
    %69 = vector.extract_strided_slice %66 {offsets = [0, 64], sizes = [16, 32], strides = [1, 1]} : vector<16x128xf32> to vector<16x32xf32>
    %70 = vector.extract_strided_slice %66 {offsets = [0, 96], sizes = [16, 32], strides = [1, 1]} : vector<16x128xf32> to vector<16x32xf32>
    %71 = tpu.transpose %68, [1, 0] : vector<16x32xf32> -> vector<32x16xf32>
    %cst_38 = arith.constant dense<0.000000e+00> : vector<16x16xf32>
    %72 = tpu.matmul %67, %71, %cst_38 {dimension_numbers = #tpu.dot_dimension_numbers<[1], [0], [0], [1], [0, 0, 1, 1], [], []>} : vector<16x32xf32>, vector<32x16xf32>, vector<16x16xf32> -> vector<16x16xf32>
    %73 = arith.addf %72, %5 : vector<16x16xf32>
    %cst_39 = arith.constant dense<0xFF800000> : vector<16xf32>
    %74 = vector.multi_reduction <maximumf>, %73, %cst_39 [1] : vector<16x16xf32> to vector<16xf32>
    %75 = vector.shape_cast %74 : vector<16xf32> to vector<16x1xf32>
    %76 = vector.broadcast %75 : vector<16x1xf32> to vector<16x16xf32>
    %77 = arith.subf %73, %76 : vector<16x16xf32>
    %78 = math.exp %77 : vector<16x16xf32>
    %79 = arith.mulf %78, %1 : vector<16x16xf32>
    %cst_40 = arith.constant dense<0.000000e+00> : vector<16xf32>
    %80 = vector.multi_reduction <add>, %79, %cst_40 [1] : vector<16x16xf32> to vector<16xf32>
    %81 = vector.shape_cast %80 : vector<16xf32> to vector<16x1xf32>
    %cst_41 = arith.constant 1.000000e-30 : f32
    %82 = vector.broadcast %cst_41 : f32 to vector<16x1xf32>
    %83 = arith.maximumf %81, %82 : vector<16x1xf32>
    %84 = tpu.reciprocal %83 {approx = true} : vector<16x1xf32> -> vector<16x1xf32>
    %85 = vector.broadcast %84 : vector<16x1xf32> to vector<16x16xf32>
    %86 = arith.mulf %79, %85 : vector<16x16xf32>
    %cst_42 = arith.constant dense<0.000000e+00> : vector<16x32xf32>
    %87 = tpu.matmul %86, %69, %cst_42 {dimension_numbers = #tpu.dot_dimension_numbers<[1], [0], [0], [1], [0, 0, 1, 1], [], []>} : vector<16x16xf32>, vector<16x32xf32>, vector<16x32xf32> -> vector<16x32xf32>
    %88 = arith.addf %87, %70 : vector<16x32xf32>
    %cst_43 = arith.constant 0.000000e+00 : f32
    %89 = vector.broadcast %cst_43 : f32 to vector<16x32xf32>
    %90 = arith.maximumf %88, %89 : vector<16x32xf32>
    %c0_44 = arith.constant 0 : index
    %c0_45 = arith.constant 0 : index
    %91 = vector.load %arg10[%c0_44, %c0_45] : memref<32x128xf32, #tpu.memory_space<vmem>>, vector<32x128xf32>
    %cst_46 = arith.constant dense<0.000000e+00> : vector<16x128xf32>
    %92 = tpu.matmul %90, %91, %cst_46 {dimension_numbers = #tpu.dot_dimension_numbers<[1], [0], [0], [1], [0, 0, 1, 1], [], []>} : vector<16x32xf32>, vector<32x128xf32>, vector<16x128xf32> -> vector<16x128xf32>
    %c0_47 = arith.constant 0 : index
    %c0_48 = arith.constant 0 : index
    %93 = vector.load %arg11[%c0_47, %c0_48] : memref<1x128xf32, #tpu.memory_space<vmem>>, vector<1x128xf32>
    %94 = vector.broadcast %93 : vector<1x128xf32> to vector<16x128xf32>
    %95 = arith.addf %92, %94 : vector<16x128xf32>
    %96 = vector.extract_strided_slice %95 {offsets = [0, 0], sizes = [16, 16], strides = [1, 1]} : vector<16x128xf32> to vector<16x16xf32>
    %97 = vector.extract_strided_slice %95 {offsets = [0, 16], sizes = [16, 16], strides = [1, 1]} : vector<16x128xf32> to vector<16x16xf32>
    %98 = vector.extract_strided_slice %95 {offsets = [0, 32], sizes = [16, 16], strides = [1, 1]} : vector<16x128xf32> to vector<16x16xf32>
    %99 = vector.extract_strided_slice %95 {offsets = [0, 48], sizes = [16, 16], strides = [1, 1]} : vector<16x128xf32> to vector<16x16xf32>
    %100 = tpu.transpose %97, [1, 0] : vector<16x16xf32> -> vector<16x16xf32>
    %cst_49 = arith.constant dense<0.000000e+00> : vector<16x16xf32>
    %101 = tpu.matmul %96, %100, %cst_49 {dimension_numbers = #tpu.dot_dimension_numbers<[1], [0], [0], [1], [0, 0, 1, 1], [], []>} : vector<16x16xf32>, vector<16x16xf32>, vector<16x16xf32> -> vector<16x16xf32>
    %102 = arith.addf %101, %5 : vector<16x16xf32>
    %cst_50 = arith.constant dense<0xFF800000> : vector<16xf32>
    %103 = vector.multi_reduction <maximumf>, %102, %cst_50 [1] : vector<16x16xf32> to vector<16xf32>
    %104 = vector.shape_cast %103 : vector<16xf32> to vector<16x1xf32>
    %105 = vector.broadcast %104 : vector<16x1xf32> to vector<16x16xf32>
    %106 = arith.subf %102, %105 : vector<16x16xf32>
    %107 = math.exp %106 : vector<16x16xf32>
    %108 = arith.mulf %107, %1 : vector<16x16xf32>
    %cst_51 = arith.constant dense<0.000000e+00> : vector<16xf32>
    %109 = vector.multi_reduction <add>, %108, %cst_51 [1] : vector<16x16xf32> to vector<16xf32>
    %110 = vector.shape_cast %109 : vector<16xf32> to vector<16x1xf32>
    %cst_52 = arith.constant 1.000000e-30 : f32
    %111 = vector.broadcast %cst_52 : f32 to vector<16x1xf32>
    %112 = arith.maximumf %110, %111 : vector<16x1xf32>
    %113 = tpu.reciprocal %112 {approx = true} : vector<16x1xf32> -> vector<16x1xf32>
    %114 = vector.broadcast %113 : vector<16x1xf32> to vector<16x16xf32>
    %115 = arith.mulf %108, %114 : vector<16x16xf32>
    %cst_53 = arith.constant dense<0.000000e+00> : vector<16x16xf32>
    %116 = tpu.matmul %115, %98, %cst_53 {dimension_numbers = #tpu.dot_dimension_numbers<[1], [0], [0], [1], [0, 0, 1, 1], [], []>} : vector<16x16xf32>, vector<16x16xf32>, vector<16x16xf32> -> vector<16x16xf32>
    %117 = arith.addf %116, %99 : vector<16x16xf32>
    %118 = vector.extract_strided_slice %95 {offsets = [0, 64], sizes = [16, 16], strides = [1, 1]} : vector<16x128xf32> to vector<16x16xf32>
    %119 = vector.extract_strided_slice %95 {offsets = [0, 80], sizes = [16, 16], strides = [1, 1]} : vector<16x128xf32> to vector<16x16xf32>
    %120 = vector.extract_strided_slice %95 {offsets = [0, 96], sizes = [16, 16], strides = [1, 1]} : vector<16x128xf32> to vector<16x16xf32>
    %121 = vector.extract_strided_slice %95 {offsets = [0, 112], sizes = [16, 16], strides = [1, 1]} : vector<16x128xf32> to vector<16x16xf32>
    %122 = tpu.transpose %119, [1, 0] : vector<16x16xf32> -> vector<16x16xf32>
    %cst_54 = arith.constant dense<0.000000e+00> : vector<16x16xf32>
    %123 = tpu.matmul %118, %122, %cst_54 {dimension_numbers = #tpu.dot_dimension_numbers<[1], [0], [0], [1], [0, 0, 1, 1], [], []>} : vector<16x16xf32>, vector<16x16xf32>, vector<16x16xf32> -> vector<16x16xf32>
    %124 = arith.addf %123, %5 : vector<16x16xf32>
    %cst_55 = arith.constant dense<0xFF800000> : vector<16xf32>
    %125 = vector.multi_reduction <maximumf>, %124, %cst_55 [1] : vector<16x16xf32> to vector<16xf32>
    %126 = vector.shape_cast %125 : vector<16xf32> to vector<16x1xf32>
    %127 = vector.broadcast %126 : vector<16x1xf32> to vector<16x16xf32>
    %128 = arith.subf %124, %127 : vector<16x16xf32>
    %129 = math.exp %128 : vector<16x16xf32>
    %130 = arith.mulf %129, %1 : vector<16x16xf32>
    %cst_56 = arith.constant dense<0.000000e+00> : vector<16xf32>
    %131 = vector.multi_reduction <add>, %130, %cst_56 [1] : vector<16x16xf32> to vector<16xf32>
    %132 = vector.shape_cast %131 : vector<16xf32> to vector<16x1xf32>
    %cst_57 = arith.constant 1.000000e-30 : f32
    %133 = vector.broadcast %cst_57 : f32 to vector<16x1xf32>
    %134 = arith.maximumf %132, %133 : vector<16x1xf32>
    %135 = tpu.reciprocal %134 {approx = true} : vector<16x1xf32> -> vector<16x1xf32>
    %136 = vector.broadcast %135 : vector<16x1xf32> to vector<16x16xf32>
    %137 = arith.mulf %130, %136 : vector<16x16xf32>
    %cst_58 = arith.constant dense<0.000000e+00> : vector<16x16xf32>
    %138 = tpu.matmul %137, %120, %cst_58 {dimension_numbers = #tpu.dot_dimension_numbers<[1], [0], [0], [1], [0, 0, 1, 1], [], []>} : vector<16x16xf32>, vector<16x16xf32>, vector<16x16xf32> -> vector<16x16xf32>
    %139 = arith.addf %138, %121 : vector<16x16xf32>
    %c0_59 = arith.constant 0 : index
    %c0_60 = arith.constant 0 : index
    %140 = vector.load %arg16[%c0_59, %c0_60] : memref<16x16xf32, #tpu.memory_space<vmem>>, vector<16x16xf32>
    tpu.vector_store %arg16[%c0_59, %c0_60], %117 {strides = array<i32>} : memref<16x16xf32, #tpu.memory_space<vmem>>, vector<16x16xf32>,
    %c0_61 = arith.constant 0 : index
    %c0_62 = arith.constant 0 : index
    %141 = vector.load %arg17[%c0_61, %c0_62] : memref<16x16xf32, #tpu.memory_space<vmem>>, vector<16x16xf32>
    tpu.vector_store %arg17[%c0_61, %c0_62], %139 {strides = array<i32>} : memref<16x16xf32, #tpu.memory_space<vmem>>, vector<16x16xf32>,
    %142 = tpu.concatenate %31, %117 in 1 : vector<16x32xf32>, vector<16x16xf32> -> vector<16x48xf32>
    %c0_63 = arith.constant 0 : index
    %c0_64 = arith.constant 0 : index
    %143 = vector.load %arg15[%c0_63, %c0_64] : memref<16x48xf32, #tpu.memory_space<vmem>>, vector<16x48xf32>
    tpu.vector_store %arg15[%c0_63, %c0_64], %142 {strides = array<i32>} : memref<16x48xf32, #tpu.memory_space<vmem>>, vector<16x48xf32>,
    %c0_65 = arith.constant 0 : index
    %c0_66 = arith.constant 0 : index
    %144 = vector.load %arg12[%c0_65, %c0_66] : memref<48x32xf32, #tpu.memory_space<vmem>>, vector<48x32xf32>
    %cst_67 = arith.constant dense<0.000000e+00> : vector<16x32xf32>
    %145 = tpu.matmul %142, %144, %cst_67 {dimension_numbers = #tpu.dot_dimension_numbers<[1], [0], [0], [1], [0, 0, 1, 1], [], []>} : vector<16x48xf32>, vector<48x32xf32>, vector<16x32xf32> -> vector<16x32xf32>
    %c0_68 = arith.constant 0 : index
    %c0_69 = arith.constant 0 : index
    %146 = vector.load %arg13[%c0_68, %c0_69] : memref<1x32xf32, #tpu.memory_space<vmem>>, vector<1x32xf32>
    %147 = vector.broadcast %146 : vector<1x32xf32> to vector<16x32xf32>
    %148 = arith.addf %145, %147 : vector<16x32xf32>
    %cst_70 = arith.constant 0.000000e+00 : f32
    %149 = vector.broadcast %cst_70 : f32 to vector<16x32xf32>
    %150 = arith.cmpf ogt, %148, %149 : vector<16x32xf32>
    %cst_71 = arith.constant 0.000000e+00 : f32
    %151 = vector.broadcast %cst_71 : f32 to vector<16x32xf32>
    %152 = arith.minimumf %148, %151 : vector<16x32xf32>
    %153 = math.exp %152 : vector<16x32xf32>
    %cst_72 = arith.constant 1.000000e+00 : f32
    %154 = vector.broadcast %cst_72 : f32 to vector<16x32xf32>
    %155 = arith.subf %153, %154 : vector<16x32xf32>
    %156 = arith.select %150, %148, %155 : vector<16x32xi1>, vector<16x32xf32>
    %c0_73 = arith.constant 0 : index
    %c0_74 = arith.constant 0 : index
    %157 = vector.load %arg18[%c0_73, %c0_74] : memref<16x32xf32, #tpu.memory_space<vmem>>, vector<16x32xf32>
    tpu.vector_store %arg18[%c0_73, %c0_74], %156 {strides = array<i32>} : memref<16x32xf32, #tpu.memory_space<vmem>>, vector<16x32xf32>,
    %c0_75 = arith.constant 0 : index
    %c0_76 = arith.constant 0 : index
    %158 = vector.load %arg14[%c0_75, %c0_76] : memref<8x48xf32, #tpu.memory_space<vmem>>, vector<8x48xf32>
    %159 = arith.mulf %142, %142 : vector<16x48xf32>
    %cst_77 = arith.constant dense<0.000000e+00> : vector<16xf32>
    %160 = vector.multi_reduction <add>, %159, %cst_77 [1] : vector<16x48xf32> to vector<16xf32>
    %161 = vector.shape_cast %160 : vector<16xf32> to vector<16x1xf32>
    %162 = arith.mulf %158, %158 : vector<8x48xf32>
    %cst_78 = arith.constant dense<0.000000e+00> : vector<8xf32>
    %163 = vector.multi_reduction <add>, %162, %cst_78 [1] : vector<8x48xf32> to vector<8xf32>
    %164 = vector.shape_cast %163 : vector<8xf32> to vector<8x1xf32>
    %165 = tpu.transpose %164, [1, 0] : vector<8x1xf32> -> vector<1x8xf32>
    %166 = vector.broadcast %161 : vector<16x1xf32> to vector<16x8xf32>
    %167 = vector.broadcast %165 : vector<1x8xf32> to vector<16x8xf32>
    %168 = arith.addf %166, %167 : vector<16x8xf32>
    %169 = tpu.transpose %158, [1, 0] : vector<8x48xf32> -> vector<48x8xf32>
    %cst_79 = arith.constant dense<0.000000e+00> : vector<16x8xf32>
    %170 = tpu.matmul %142, %169, %cst_79 {dimension_numbers = #tpu.dot_dimension_numbers<[1], [0], [0], [1], [0, 0, 1, 1], [], []>} : vector<16x48xf32>, vector<48x8xf32>, vector<16x8xf32> -> vector<16x8xf32>
    %cst_80 = arith.constant 2.000000e+00 : f32
    %171 = vector.broadcast %cst_80 : f32 to vector<16x8xf32>
    %172 = arith.mulf %171, %170 : vector<16x8xf32>
    %173 = arith.subf %168, %172 : vector<16x8xf32>
    %cst_81 = arith.constant 0.000000e+00 : f32
    %174 = vector.broadcast %cst_81 : f32 to vector<16x8xf32>
    %175 = arith.maximumf %173, %174 : vector<16x8xf32>
    %cst_82 = arith.constant 1.000000e+00 : f32
    %176 = vector.broadcast %cst_82 : f32 to vector<16x8xf32>
    %177 = arith.divf %175, %176 : vector<16x8xf32>
    %cst_83 = arith.constant 1.000000e+00 : f32
    %178 = vector.broadcast %cst_83 : f32 to vector<16x8xf32>
    %179 = arith.addf %178, %177 : vector<16x8xf32>
    %cst_84 = arith.constant 1.000000e+00 : f32
    %180 = vector.broadcast %cst_84 : f32 to vector<16x8xf32>
    %181 = arith.divf %180, %179 : vector<16x8xf32>
    %cst_85 = arith.constant dense<0.000000e+00> : vector<16xf32>
    %182 = vector.multi_reduction <add>, %181, %cst_85 [1] : vector<16x8xf32> to vector<16xf32>
    %183 = vector.shape_cast %182 : vector<16xf32> to vector<16x1xf32>
    %184 = vector.broadcast %183 : vector<16x1xf32> to vector<16x8xf32>
    %185 = arith.divf %181, %184 : vector<16x8xf32>
    %c0_86 = arith.constant 0 : index
    %c0_87 = arith.constant 0 : index
    %186 = vector.load %arg19[%c0_86, %c0_87] : memref<16x8xf32, #tpu.memory_space<vmem>>, vector<16x8xf32>
    tpu.vector_store %arg19[%c0_86, %c0_87], %185 {strides = array<i32>} : memref<16x8xf32, #tpu.memory_space<vmem>>, vector<16x8xf32>,
    return
  }
}

</mosaic_0001>

<llo_original>
// kernel: st_transformer_forward.1
$region0: #{st_transformer_forward.1}
  #allocation0 [shape = 'u32[]', space=smem, size = 0x4, offset = 0x4, fixed_abs, tag = 'smem constant byte address 0x4 - core index']
  #allocation1 [shape = 'u32[144,128]{1,0:T(1,128)}', space=vmem, size = 0x12000, scoped, tag = 'internal scratch']
  %s0 = inlined_call_operand.vmem [shape: f32[16,32], index: 0, kind: input, shape index: {}]
  %s1 = inlined_call_operand.vmem [shape: f32[16,16], index: 1, kind: input, shape index: {}]
  %s2 = inlined_call_operand.vmem [shape: f32[32,64], index: 2, kind: input, shape index: {}]
  %s3 = inlined_call_operand.vmem [shape: f32[1,64], index: 3, kind: input, shape index: {}]
  %s4 = inlined_call_operand.vmem [shape: f32[64,32], index: 4, kind: input, shape index: {}]
  %s5 = inlined_call_operand.vmem [shape: f32[1,32], index: 5, kind: input, shape index: {}]
  %s6 = inlined_call_operand.vmem [shape: f32[32,128], index: 6, kind: input, shape index: {}]
  %s7 = inlined_call_operand.vmem [shape: f32[1,128], index: 7, kind: input, shape index: {}]
  %s8 = inlined_call_operand.vmem [shape: f32[32,128], index: 8, kind: input, shape index: {}]
  %s9 = inlined_call_operand.hbm [shape: f32[1,128], index: 9, kind: input, shape index: {}]
  %s10 = inlined_call_operand.vmem [shape: f32[32,128], index: 10, kind: input, shape index: {}]
  %s11 = inlined_call_operand.vmem [shape: f32[1,128], index: 11, kind: input, shape index: {}]
  %s12 = inlined_call_operand.vmem [shape: f32[48,32], index: 12, kind: input, shape index: {}]
  %s13 = inlined_call_operand.hbm [shape: f32[1,32], index: 13, kind: input, shape index: {}]
  %s14 = inlined_call_operand.hbm [shape: f32[8,48], index: 14, kind: input, shape index: {}]
  %s15 = inlined_call_operand.hbm [shape: f32[16,48], index: 15, kind: output, shape index: {0}]
  %s16 = inlined_call_operand.vmem [shape: f32[16,16], index: 16, kind: output, shape index: {1}]
  %s17 = inlined_call_operand.hbm [shape: f32[16,16], index: 17, kind: output, shape index: {2}]
  %s18 = inlined_call_operand.hbm [shape: f32[16,32], index: 18, kind: output, shape index: {3}]
  %s19 = inlined_call_operand.vmem [shape: f32[16,8], index: 19, kind: output, shape index: {4}]
  %s20 = inlined_call_operand.hbm [shape: f32[16,32], index: 20, kind: output, shape index: {5}]
  %21 = xla_tuple %s15, %s16, %s17, %s18, %s19, %s20
  %s22 = sld [smem:[#allocation0]]
  $region122: #{st_transformer_forward.1} parent=0
    _
  %s24 = ssub.s32 1, %s22
  %s25 = scalar_select 0, %s24, %s22
  $region1: #{st_transformer_forward.1} parent=0
    #allocation2 [shape = 'u8[512]{0}', space=vmem, size = 0x400, scoped, tag = 'input window, operand 9, single buffered']
    #allocation3 [shape = 's32[1]{0}', space=sflag, size = 0x4, scoped, tag = 'scoped memory for st_transformer_forward.1']
    #allocation4 [shape = 's32[1]{0}', space=sflag, size = 0x4, scoped, tag = 'scoped memory for st_transformer_forward.1']
    #allocation5 [shape = 'u8[512]{0}', space=vmem, size = 0x400, scoped, tag = 'input window, operand 13, single buffered']
    #allocation6 [shape = 's32[1]{0}', space=sflag, size = 0x4, scoped, tag = 'scoped memory for st_transformer_forward.1']
    #allocation7 [shape = 'u8[4096]{0}', space=vmem, size = 0x1000, scoped, tag = 'input window, operand 14, single buffered']
    #allocation8 [shape = 'u8[8192]{0}', space=vmem, size = 0x2000, scoped, tag = 'output window, operand 0, single buffered']
    #allocation9 [shape = 'u8[8192]{0}', space=vmem, size = 0x2000, scoped, tag = 'output window, operand 2, single buffered']
    #allocation10 [shape = 's32[1]{0}', space=sflag, size = 0x4, scoped, tag = 'scoped memory for st_transformer_forward.1']
    #allocation11 [shape = 'u8[8192]{0}', space=vmem, size = 0x2000, scoped, tag = 'output window, operand 3, single buffered']
    #allocation12 [shape = 'u8[8192]{0}', space=vmem, size = 0x2000, scoped, tag = 'output window, operand 5, single buffered']
    #allocation13 [shape = 's32[1]{0}', space=sflag, size = 0x4, scoped, tag = 'scoped memory for st_transformer_forward.1']
    %26 = vsyncpa [#allocation3], 0
    %27 = vsyncpa [#allocation6], 0
    %28 = vsyncpa [#allocation4], 0
    %29 = vsyncpa [#allocation10], 0
    %30 = vsyncpa [#allocation13], 0
    // Predicated region
    $region2: #{st_transformer_forward.1} parent=1 // pred_check
      _
    $region3: #{st_transformer_forward.1} parent=1 // pred_check_branch
      %32 = sbr.rel (0) target = $region5
    $region4: #{st_transformer_forward.1} parent=1 // pred_region
      _
    $region5: #{st_transformer_forward.1} parent=1 // pred_fallthru
      _
    // Predicated region
    $region6: #{st_transformer_forward.1} parent=1 // pred_check
      _
    $region7: #{st_transformer_forward.1} parent=1 // pred_check_branch
      %34 = sbr.rel (0) target = $region9
    $region8: #{st_transformer_forward.1} parent=1 // pred_region
      _
    $region9: #{st_transformer_forward.1} parent=1 // pred_fallthru
      _
    // Predicated region
    $region10: #{st_transformer_forward.1} parent=1 // pred_check
      _
    $region11: #{st_transformer_forward.1} parent=1 // pred_check_branch
      %36 = sbr.rel (0) target = $region13
    $region12: #{st_transformer_forward.1} parent=1 // pred_region
      _
    $region13: #{st_transformer_forward.1} parent=1 // pred_fallthru
      _
    // Predicated region
    $region14: #{st_transformer_forward.1} parent=1 // pred_check
      _
    $region15: #{st_transformer_forward.1} parent=1 // pred_check_branch
      %38 = sbr.rel (0) target = $region17
    $region16: #{st_transformer_forward.1} parent=1 // pred_region
      _
    $region17: #{st_transformer_forward.1} parent=1 // pred_fallthru
      _
    // Predicated region
    $region18: #{st_transformer_forward.1} parent=1 // pred_check
      _
    $region19: #{st_transformer_forward.1} parent=1 // pred_check_branch
      %40 = sbr.rel (0) target = $region21
    $region20: #{st_transformer_forward.1} parent=1 // pred_region
      _
    $region21: #{st_transformer_forward.1} parent=1 // pred_fallthru
      _
    // Predicated region
    $region22: #{st_transformer_forward.1} parent=1 // pred_check
      _
    $region23: #{st_transformer_forward.1} parent=1 // pred_check_branch
      %42 = sbr.rel (0) target = $region25
    $region24: #{st_transformer_forward.1} parent=1 // pred_region
      _
    $region25: #{st_transformer_forward.1} parent=1 // pred_fallthru
      _
    // Predicated region
    $region26: #{st_transformer_forward.1} parent=1 // pred_check
      _
    $region27: #{st_transformer_forward.1} parent=1 // pred_check_branch
      %44 = sbr.rel (0) target = $region29
    $region28: #{st_transformer_forward.1} parent=1 // pred_region
      _
    $region29: #{st_transformer_forward.1} parent=1 // pred_fallthru
      _
    // Predicated region
    $region30: #{st_transformer_forward.1} parent=1 // pred_check
      _
    $region31: #{st_transformer_forward.1} parent=1 // pred_check_branch
      %46 = sbr.rel (0) target = $region33
    $region32: #{st_transformer_forward.1} parent=1 // pred_region
      _
    $region33: #{st_transformer_forward.1} parent=1 // pred_fallthru
      _
    // Predicated region
    $region34: #{st_transformer_forward.1} parent=1 // pred_check
      _
    $region35: #{st_transformer_forward.1} parent=1 // pred_check_branch
      %48 = sbr.rel (0) target = $region37
    $region36: #{st_transformer_forward.1} parent=1 // pred_region
      _
    $region37: #{st_transformer_forward.1} parent=1 // pred_fallthru
      _
    // Predicated region
    $region38: #{st_transformer_forward.1} parent=1 // pred_check
      _
    $region39: #{st_transformer_forward.1} parent=1 // pred_check_branch
      %50 = sbr.rel (0) target = $region41
    $region40: #{st_transformer_forward.1} parent=1 // pred_region
      %s52 = ssub.s32 16, 16
      %53 = vsyncadd [#allocation3], %s52
      %s55 = sshll.u32 [#allocation2], 4
      %s56 = int_to_ptr.vmem [resolvable:$true] %s55
      %58 = dma.hbm_to_vmem [thread:$0]  %s9, 16, %s56, [#allocation3]
    $region41: #{st_transformer_forward.1} parent=1 // pred_fallthru
      _
    // Predicated region
    $region42: #{st_transformer_forward.1} parent=1 // pred_check
      _
    $region43: #{st_transformer_forward.1} parent=1 // pred_check_branch
      %60 = sbr.rel (0) target = $region45
    $region44: #{st_transformer_forward.1} parent=1 // pred_region
      _
    $region45: #{st_transformer_forward.1} parent=1 // pred_fallthru
      _
    // Predicated region
    $region46: #{st_transformer_forward.1} parent=1 // pred_check
      _
    $region47: #{st_transformer_forward.1} parent=1 // pred_check_branch
      %62 = sbr.rel (0) target = $region49
    $region48: #{st_transformer_forward.1} parent=1 // pred_region
      _
    $region49: #{st_transformer_forward.1} parent=1 // pred_fallthru
      _
    // Predicated region
    $region50: #{st_transformer_forward.1} parent=1 // pred_check
      _
    $region51: #{st_transformer_forward.1} parent=1 // pred_check_branch
      %64 = sbr.rel (0) target = $region53
    $region52: #{st_transformer_forward.1} parent=1 // pred_region
      _
    $region53: #{st_transformer_forward.1} parent=1 // pred_fallthru
      _
    // Predicated region
    $region54: #{st_transformer_forward.1} parent=1 // pred_check
      _
    $region55: #{st_transformer_forward.1} parent=1 // pred_check_branch
      %66 = sbr.rel (0) target = $region57
    $region56: #{st_transformer_forward.1} parent=1 // pred_region
      %s68 = ssub.s32 16, 16
      %69 = vsyncadd [#allocation6], %s68
      %s71 = sshll.u32 [#allocation5], 4
      %s72 = int_to_ptr.vmem [resolvable:$true] %s71
      %74 = dma.hbm_to_vmem [thread:$0]  %s13, 16, %s72, [#allocation6]
    $region57: #{st_transformer_forward.1} parent=1 // pred_fallthru
      _
    // Predicated region
    $region58: #{st_transformer_forward.1} parent=1 // pred_check
      _
    $region59: #{st_transformer_forward.1} parent=1 // pred_check_branch
      %76 = sbr.rel (0) target = $region61
    $region60: #{st_transformer_forward.1} parent=1 // pred_region
      %s78 = ssub.s32 128, 128
      %79 = vsyncadd [#allocation6], %s78
      %s81 = sshll.u32 [#allocation7], 4
      %s82 = int_to_ptr.vmem [resolvable:$true] %s81
      %84 = dma.hbm_to_vmem [thread:$0]  %s14, 128, %s82, [#allocation6]
    $region61: #{st_transformer_forward.1} parent=1 // pred_fallthru
      _
    // Predicated region
    $region62: #{st_transformer_forward.1} parent=1 // pred_check
      _
    $region63: #{st_transformer_forward.1} parent=1 // pred_check_branch
      %86 = sbr.rel (0) target = $region65
    $region64: #{st_transformer_forward.1} parent=1 // pred_region
      %87 = dma.done [#allocation3], 16
    $region65: #{st_transformer_forward.1} parent=1 // pred_fallthru
      _
    // Predicated region
    $region66: #{st_transformer_forward.1} parent=1 // pred_check
      _
    $region67: #{st_transformer_forward.1} parent=1 // pred_check_branch
      %89 = sbr.rel (0) target = $region69
    $region68: #{st_transformer_forward.1} parent=1 // pred_region
      %90 = dma.done [#allocation6], 16
    $region69: #{st_transformer_forward.1} parent=1 // pred_fallthru
      _
    // Predicated region
    $region70: #{st_transformer_forward.1} parent=1 // pred_check
      _
    $region71: #{st_transformer_forward.1} parent=1 // pred_check_branch
      %92 = sbr.rel (0) target = $region73
    $region72: #{st_transformer_forward.1} parent=1 // pred_region
      %93 = dma.done [#allocation6], 128
    $region73: #{st_transformer_forward.1} parent=1 // pred_fallthru
      _
    %v94 = vld [vmem:[%s0] sm:$0xff]
    %v95 = vld [vmem:[%s0 + $0x8] sm:$0xff]
    %v96 = vld [vmem:[%s1] sm:$0xff]
    %v97 = vld [vmem:[%s1 + $0x8] sm:$0xff]
    %v98 = vsub.f32 %v96, 1.0
    %v99 = vsub.f32 %v97, 1.0
    %v100 = vmul.f32 %v98, 1e+30
    %v101 = vmul.f32 %v99, 1e+30
    %v102 = vld [vmem:[%s2] sm:$0xff]
    %v103 = vld [vmem:[%s2 + $0x8] sm:$0xff]
    %v104 = vld [vmem:[%s2 + $0x10] sm:$0xff]
    %v105 = vld [vmem:[%s2 + $0x18] sm:$0xff]
    %v106 = vld [vmem:[%s3] sm:$0x1]
    %v108 = vlaneseq
    %v109 = vshrl.u32 %v108, 7
    %v110 = vsub.s32 0, %v109
    %v111 = vrot.slane %v106, %v110
    %vm113 = vcmask 261120
    %v115 = vsel %vm113, %v94, 0
    %v118 = vsel %vm113, %v95, 0
    %120 = vmatprep.subr.mxu0 0.0
    %121 = vmatpush1.msra.mxu0 %v102
    %122 = vmatprep.subr.mxu0 0.0
    %123 = vmatpush1.msra.mxu0 %v103
    %124 = vmatprep.subr.mxu0 0.0
    %125 = vmatpush1.msra.mxu0 %v104
    %126 = vmatprep.subr.mxu0 0.0
    %127 = vmatpush1.msra.mxu0 %v105
    %128 = vmatprep.subr.mxu0 0.0
    %129 = vmatpush1.msra.mxu0 0.0
    %130 = vmatprep.subr.mxu0 0.0
    %131 = vmatpush1.msra.mxu0 0.0
    %132 = vmatprep.subr.mxu0 0.0
    %133 = vmatpush1.msra.mxu0 0.0
    %134 = vmatprep.subr.mxu0 0.0
    %135 = vmatpush1.msra.mxu0 0.0
    %136 = vmatprep.subr.mxu0 0.0
    %137 = vmatpush1.msra.mxu0 0.0
    %138 = vmatprep.subr.mxu0 0.0
    %139 = vmatpush1.msra.mxu0 0.0
    %140 = vmatprep.subr.mxu0 0.0
    %141 = vmatpush1.msra.mxu0 0.0
    %142 = vmatprep.subr.mxu0 0.0
    %143 = vmatpush1.msra.mxu0 0.0
    %144 = vmatprep.subr.mxu0 0.0
    %145 = vmatpush1.msra.mxu0 0.0
    %146 = vmatprep.subr.mxu0 0.0
    %147 = vmatpush1.msra.mxu0 0.0
    %148 = vmatprep.subr.mxu0 0.0
    %149 = vmatpush1.msra.mxu0 0.0
    %150 = vmatprep.subr.mxu0 0.0
    %151 = vmatpush1.msra.mxu0 0.0
    %152 = vmatprep.subr.mxu0 0.0
    %153 = vmatpush1.msra.mxu0 0.0
    %154 = vmatprep.subr.mxu0 0.0
    %155 = vmatpush1.msra.mxu0 0.0
    %156 = vmatprep.subr.mxu0 0.0
    %157 = vmatpush1.msra.mxu0 0.0
    %158 = vmatprep.subr.mxu0 0.0
    %159 = vmatpush1.msra.mxu0 0.0
    %160 = vmatprep.subr.mxu0 0.0
    %161 = vmatpush1.msra.mxu0 0.0
    %162 = vmatprep.subr.mxu0 0.0
    %163 = vmatpush1.msra.mxu0 0.0
    %164 = vmatprep.subr.mxu0 0.0
    %165 = vmatpush1.msra.mxu0 0.0
    %166 = vmatprep.subr.mxu0 0.0
    %167 = vmatpush1.msra.mxu0 0.0
    %168 = vmatprep.subr.mxu0 0.0
    %169 = vmatpush1.msra.mxu0 0.0
    %170 = vmatprep.subr.mxu0 0.0
    %171 = vmatpush1.msra.mxu0 0.0
    %172 = vmatprep.subr.mxu0 0.0
    %173 = vmatpush1.msra.mxu0 0.0
    %174 = vmatprep.subr.mxu0 0.0
    %175 = vmatpush1.msra.mxu0 0.0
    %176 = vmatprep.subr.mxu0 0.0
    %177 = vmatpush1.msra.mxu0 0.0
    %178 = vmatprep.subr.mxu0 0.0
    %179 = vmatpush1.msra.mxu0 0.0
    %180 = vmatprep.subr.mxu0 0.0
    %181 = vmatpush1.msra.mxu0 0.0
    %182 = vmatprep.subr.mxu0 0.0
    %183 = vmatpush1.msra.mxu0 0.0
    %184 = vmatprep.mubr.f32.mxu0 0.0
    %185 = vmatmul.mubr.f32.gmra.mrb[0].mxu0 %v115
    %v186 = vpop.f32.mrb[0].mxu0
    %v187 = vadd.f32 %v111, %v186
    %v188 = vpop.f32.mrb[0].mxu0
    %189 = vmatprep.mubr.f32.mxu0 0.0
    %190 = vmatmul.mubr.f32.gmra.mrb[0].mxu0 %v118
    %v191 = vpop.f32.mrb[0].mxu0
    %v192 = vadd.f32 %v111, %v191
    %v193 = vpop.f32.mrb[0].mxu0
    %194 = vdwg.mxu0
    %vm195 = vcmp.gt.f32.partialorder %v187, 0.0
    %vm196 = vcmp.gt.f32.partialorder %v192, 0.0
    %v197 = vmin.f32 %v187, 0.0
    %v198 = vmin.f32 %v192, 0.0
    %v199 = vmul.f32 %v197, 1.442695
    %v200 = vpow.pop %v199
    %v201 = vmul.f32 %v198, 1.442695
    %v202 = vpow.pop %v201
    %v203 = vsub.f32 %v200, 1.0
    %v204 = vsub.f32 %v202, 1.0
    %v205 = vsel %vm195, %v187, %v203
    %v206 = vsel %vm196, %v192, %v204
    %v207 = vld [vmem:[%s4] sm:$0xff]
    %v208 = vld [vmem:[%s4 + $0x8] sm:$0xff]
    %v209 = vld [vmem:[%s4 + $0x10] sm:$0xff]
    %v210 = vld [vmem:[%s4 + $0x18] sm:$0xff]
    %v211 = vld [vmem:[%s4 + $0x20] sm:$0xff]
    %v212 = vld [vmem:[%s4 + $0x28] sm:$0xff]
    %v213 = vld [vmem:[%s4 + $0x30] sm:$0xff]
    %v214 = vld [vmem:[%s4 + $0x38] sm:$0xff]
    %v215 = vld [vmem:[%s5] sm:$0x1]
    %v217 = vlaneseq
    %v218 = vshrl.u32 %v217, 7
    %v219 = vsub.s32 0, %v218
    %v220 = vrot.slane %v215, %v219
    %vm222 = vcmask 523264
    %v224 = vsel %vm222, %v205, 0
    %v227 = vsel %vm222, %v206, 0
    %229 = vmatprep.subr.mxu0 0.0
    %230 = vmatpush1.msra.mxu0 %v207
    %231 = vmatprep.subr.mxu0 0.0
    %232 = vmatpush1.msra.mxu0 %v208
    %233 = vmatprep.subr.mxu0 0.0
    %234 = vmatpush1.msra.mxu0 %v209
    %235 = vmatprep.subr.mxu0 0.0
    %236 = vmatpush1.msra.mxu0 %v210
    %237 = vmatprep.subr.mxu0 0.0
    %238 = vmatpush1.msra.mxu0 %v211
    %239 = vmatprep.subr.mxu0 0.0
    %240 = vmatpush1.msra.mxu0 %v212
    %241 = vmatprep.subr.mxu0 0.0
    %242 = vmatpush1.msra.mxu0 %v213
    %243 = vmatprep.subr.mxu0 0.0
    %244 = vmatpush1.msra.mxu0 %v214
    %245 = vmatprep.subr.mxu0 0.0
    %246 = vmatpush1.msra.mxu0 0.0
    %247 = vmatprep.subr.mxu0 0.0
    %248 = vmatpush1.msra.mxu0 0.0
    %249 = vmatprep.subr.mxu0 0.0
    %250 = vmatpush1.msra.mxu0 0.0
    %251 = vmatprep.subr.mxu0 0.0
    %252 = vmatpush1.msra.mxu0 0.0
    %253 = vmatprep.subr.mxu0 0.0
    %254 = vmatpush1.msra.mxu0 0.0
    %255 = vmatprep.subr.mxu0 0.0
    %256 = vmatpush1.msra.mxu0 0.0
    %257 = vmatprep.subr.mxu0 0.0
    %258 = vmatpush1.msra.mxu0 0.0
    %259 = vmatprep.subr.mxu0 0.0
    %260 = vmatpush1.msra.mxu0 0.0
    %261 = vmatprep.subr.mxu0 0.0
    %262 = vmatpush1.msra.mxu0 0.0
    %263 = vmatprep.subr.mxu0 0.0
    %264 = vmatpush1.msra.mxu0 0.0
    %265 = vmatprep.subr.mxu0 0.0
    %266 = vmatpush1.msra.mxu0 0.0
    %267 = vmatprep.subr.mxu0 0.0
    %268 = vmatpush1.msra.mxu0 0.0
    %269 = vmatprep.subr.mxu0 0.0
    %270 = vmatpush1.msra.mxu0 0.0
    %271 = vmatprep.subr.mxu0 0.0
    %272 = vmatpush1.msra.mxu0 0.0
    %273 = vmatprep.subr.mxu0 0.0
    %274 = vmatpush1.msra.mxu0 0.0
    %275 = vmatprep.subr.mxu0 0.0
    %276 = vmatpush1.msra.mxu0 0.0
    %277 = vmatprep.subr.mxu0 0.0
    %278 = vmatpush1.msra.mxu0 0.0
    %279 = vmatprep.subr.mxu0 0.0
    %280 = vmatpush1.msra.mxu0 0.0
    %281 = vmatprep.subr.mxu0 0.0
    %282 = vmatpush1.msra.mxu0 0.0
    %283 = vmatprep.subr.mxu0 0.0
    %284 = vmatpush1.msra.mxu0 0.0
    %285 = vmatprep.subr.mxu0 0.0
    %286 = vmatpush1.msra.mxu0 0.0
    %287 = vmatprep.subr.mxu0 0.0
    %288 = vmatpush1.msra.mxu0 0.0
    %289 = vmatprep.subr.mxu0 0.0
    %290 = vmatpush1.msra.mxu0 0.0
    %291 = vmatprep.subr.mxu0 0.0
    %292 = vmatpush1.msra.mxu0 0.0
    %293 = vmatprep.mubr.f32.mxu0 0.0
    %294 = vmatmul.mubr.f32.gmra.mrb[0].mxu0 %v224
    %v295 = vpop.f32.mrb[0].mxu0
    %v296 = vadd.f32 %v220, %v295
    %v297 = vpop.f32.mrb[0].mxu0
    %298 = vmatprep.mubr.f32.mxu0 0.0
    %299 = vmatmul.mubr.f32.gmra.mrb[0].mxu0 %v227
    %v300 = vpop.f32.mrb[0].mxu0
    %v301 = vadd.f32 %v220, %v300
    %v302 = vpop.f32.mrb[0].mxu0
    %303 = vdwg.mxu0
    %vm304 = vcmp.gt.f32.partialorder %v296, 0.0
    %vm305 = vcmp.gt.f32.partialorder %v301, 0.0
    %v306 = vmin.f32 %v296, 0.0
    %v307 = vmin.f32 %v301, 0.0
    %v308 = vmul.f32 %v306, 1.442695
    %v309 = vpow.pop %v308
    %v310 = vmul.f32 %v307, 1.442695
    %v311 = vpow.pop %v310
    %v312 = vsub.f32 %v309, 1.0
    %v313 = vsub.f32 %v311, 1.0
    %v314 = vsel %vm304, %v296, %v312
    %v315 = vsel %vm305, %v301, %v313
    %316 = vst.msk [vmem:[#allocation12] sm:$0xff] %vm113, %v314
    %317 = vst.msk [vmem:[#allocation12 + $0x8] sm:$0xff] %vm113, %v315
    %v318 = vld [vmem:[%s6] sm:$0xff]
    %v319 = vld [vmem:[%s6 + $0x8] sm:$0xff]
    %v320 = vld [vmem:[%s6 + $0x10] sm:$0xff]
    %v321 = vld [vmem:[%s6 + $0x18] sm:$0xff]
    %v322 = vld [vmem:[%s7] sm:$0x1]
    %v324 = vlaneseq
    %v325 = vshrl.u32 %v324, 7
    %v326 = vsub.s32 0, %v325
    %v327 = vrot.slane %v322, %v326
    %v330 = vsel %vm113, %v314, 0
    %v333 = vsel %vm113, %v315, 0
    %335 = vmatprep.subr.mxu0 0.0
    %336 = vmatpush1.msra.mxu0 %v318
    %337 = vmatprep.subr.mxu0 0.0
    %338 = vmatpush1.msra.mxu0 %v319
    %339 = vmatprep.subr.mxu0 0.0
    %340 = vmatpush1.msra.mxu0 %v320
    %341 = vmatprep.subr.mxu0 0.0
    %342 = vmatpush1.msra.mxu0 %v321
    %343 = vmatprep.subr.mxu0 0.0
    %344 = vmatpush1.msra.mxu0 0.0
    %345 = vmatprep.subr.mxu0 0.0
    %346 = vmatpush1.msra.mxu0 0.0
    %347 = vmatprep.subr.mxu0 0.0
    %348 = vmatpush1.msra.mxu0 0.0
    %349 = vmatprep.subr.mxu0 0.0
    %350 = vmatpush1.msra.mxu0 0.0
    %351 = vmatprep.subr.mxu0 0.0
    %352 = vmatpush1.msra.mxu0 0.0
    %353 = vmatprep.subr.mxu0 0.0
    %354 = vmatpush1.msra.mxu0 0.0
    %355 = vmatprep.subr.mxu0 0.0
    %356 = vmatpush1.msra.mxu0 0.0
    %357 = vmatprep.subr.mxu0 0.0
    %358 = vmatpush1.msra.mxu0 0.0
    %359 = vmatprep.subr.mxu0 0.0
    %360 = vmatpush1.msra.mxu0 0.0
    %361 = vmatprep.subr.mxu0 0.0
    %362 = vmatpush1.msra.mxu0 0.0
    %363 = vmatprep.subr.mxu0 0.0
    %364 = vmatpush1.msra.mxu0 0.0
    %365 = vmatprep.subr.mxu0 0.0
    %366 = vmatpush1.msra.mxu0 0.0
    %367 = vmatprep.subr.mxu0 0.0
    %368 = vmatpush1.msra.mxu0 0.0
    %369 = vmatprep.subr.mxu0 0.0
    %370 = vmatpush1.msra.mxu0 0.0
    %371 = vmatprep.subr.mxu0 0.0
    %372 = vmatpush1.msra.mxu0 0.0
    %373 = vmatprep.subr.mxu0 0.0
    %374 = vmatpush1.msra.mxu0 0.0
    %375 = vmatprep.subr.mxu0 0.0
    %376 = vmatpush1.msra.mxu0 0.0
    %377 = vmatprep.subr.mxu0 0.0
    %378 = vmatpush1.msra.mxu0 0.0
    %379 = vmatprep.subr.mxu0 0.0
    %380 = vmatpush1.msra.mxu0 0.0
    %381 = vmatprep.subr.mxu0 0.0
    %382 = vmatpush1.msra.mxu0 0.0
    %383 = vmatprep.subr.mxu0 0.0
    %384 = vmatpush1.msra.mxu0 0.0
    %385 = vmatprep.subr.mxu0 0.0
    %386 = vmatpush1.msra.mxu0 0.0
    %387 = vmatprep.subr.mxu0 0.0
    %388 = vmatpush1.msra.mxu0 0.0
    %389 = vmatprep.subr.mxu0 0.0
    %390 = vmatpush1.msra.mxu0 0.0
    %391 = vmatprep.subr.mxu0 0.0
    %392 = vmatpush1.msra.mxu0 0.0
    %393 = vmatprep.subr.mxu0 0.0
    %394 = vmatpush1.msra.mxu0 0.0
    %395 = vmatprep.subr.mxu0 0.0
    %396 = vmatpush1.msra.mxu0 0.0
    %397 = vmatprep.subr.mxu0 0.0
    %398 = vmatpush1.msra.mxu0 0.0
    %399 = vmatprep.mubr.f32.mxu0 0.0
    %400 = vmatmul.mubr.f32.gmra.mrb[0].mxu0 %v330
    %v401 = vpop.f32.mrb[0].mxu0
    %v402 = vadd.f32 %v327, %v401
    %v403 = vpop.f32.mrb[0].mxu0
    %404 = vmatprep.mubr.f32.mxu0 0.0
    %405 = vmatmul.mubr.f32.gmra.mrb[0].mxu0 %v333
    %v406 = vpop.f32.mrb[0].mxu0
    %v407 = vadd.f32 %v327, %v406
    %v408 = vpop.f32.mrb[0].mxu0
    %409 = vdwg.mxu0
    %412 = vrot.lane.b32.xlu0 %v402, 96
    %v413 = vpop.permute.xlu0 %412
    %414 = vrot.lane.b32.xlu0 %v407, 96
    %v415 = vpop.permute.xlu0 %414
    %v416 = vsel %vm113, %v402, 0
    %v418 = vsel %vm113, %v407, 0
    %v420 = vsel %vm113, %v413, 0
    %v422 = vsel %vm113, %v415, 0
    %424 = vmatprep.subr.mxu0 0.0
    %425 = vmatpush1.xpose.msra.mxu0 %v420
    %426 = vmatprep.subr.mxu0 0.0
    %427 = vmatpush1.xpose.msra.mxu0 %v422
    %428 = vmatprep.subr.mxu0 0.0
    %429 = vmatpush1.xpose.msra.mxu0 0.0
    %430 = vmatprep.subr.mxu0 0.0
    %431 = vmatpush1.xpose.msra.mxu0 0.0
    %432 = vmatprep.subr.mxu0 0.0
    %433 = vmatpush1.xpose.msra.mxu0 0.0
    %434 = vmatprep.subr.mxu0 0.0
    %435 = vmatpush1.xpose.msra.mxu0 0.0
    %436 = vmatprep.subr.mxu0 0.0
    %437 = vmatpush1.xpose.msra.mxu0 0.0
    %438 = vmatprep.subr.mxu0 0.0
    %439 = vmatpush1.xpose.msra.mxu0 0.0
    %440 = vmatprep.subr.mxu0 0.0
    %441 = vmatpush1.xpose.msra.mxu0 0.0
    %442 = vmatprep.subr.mxu0 0.0
    %443 = vmatpush1.xpose.msra.mxu0 0.0
    %444 = vmatprep.subr.mxu0 0.0
    %445 = vmatpush1.xpose.msra.mxu0 0.0
    %446 = vmatprep.subr.mxu0 0.0
    %447 = vmatpush1.xpose.msra.mxu0 0.0
    %448 = vmatprep.subr.mxu0 0.0
    %449 = vmatpush1.xpose.msra.mxu0 0.0
    %450 = vmatprep.subr.mxu0 0.0
    %451 = vmatpush1.xpose.msra.mxu0 0.0
    %452 = vmatprep.subr.mxu0 0.0
    %453 = vmatpush1.xpose.msra.mxu0 0.0
    %454 = vmatprep.subr.mxu0 0.0
    %455 = vmatpush1.xpose.msra.mxu0 0.0
    %456 = vmatprep.subr.mxu0 0.0
    %457 = vmatpush1.xpose.msra.mxu0 0.0
    %458 = vmatprep.subr.mxu0 0.0
    %459 = vmatpush1.xpose.msra.mxu0 0.0
    %460 = vmatprep.subr.mxu0 0.0
    %461 = vmatpush1.xpose.msra.mxu0 0.0
    %462 = vmatprep.subr.mxu0 0.0
    %463 = vmatpush1.xpose.msra.mxu0 0.0
    %464 = vmatprep.subr.mxu0 0.0
    %465 = vmatpush1.xpose.msra.mxu0 0.0
    %466 = vmatprep.subr.mxu0 0.0
    %467 = vmatpush1.xpose.msra.mxu0 0.0
    %468 = vmatprep.subr.mxu0 0.0
    %469 = vmatpush1.xpose.msra.mxu0 0.0
    %470 = vmatprep.subr.mxu0 0.0
    %471 = vmatpush1.xpose.msra.mxu0 0.0
    %472 = vmatprep.subr.mxu0 0.0
    %473 = vmatpush1.xpose.msra.mxu0 0.0
    %474 = vmatprep.subr.mxu0 0.0
    %475 = vmatpush1.xpose.msra.mxu0 0.0
    %476 = vmatprep.subr.mxu0 0.0
    %477 = vmatpush1.xpose.msra.mxu0 0.0
    %478 = vmatprep.subr.mxu0 0.0
    %479 = vmatpush1.xpose.msra.mxu0 0.0
    %480 = vmatprep.subr.mxu0 0.0
    %481 = vmatpush1.xpose.msra.mxu0 0.0
    %482 = vmatprep.subr.mxu0 0.0
    %483 = vmatpush1.xpose.msra.mxu0 0.0
    %484 = vmatprep.subr.mxu0 0.0
    %485 = vmatpush1.xpose.msra.mxu0 0.0
    %486 = vmatprep.subr.mxu0 0.0
    %487 = vmatpush1.xpose.msra.mxu0 0.0
    %488 = vmatprep.mubr.f32.mxu0 0.0
    %489 = vmatmul.mubr.f32.gmra.mrb[0].mxu0 %v416
    %v490 = vpop.f32.mrb[0].mxu0
    %v491 = vadd.f32 %v100, %v490
    %v492 = vpop.f32.mrb[0].mxu0
    %493 = vmatprep.mubr.f32.mxu0 0.0
    %494 = vmatmul.mubr.f32.gmra.mrb[0].mxu0 %v418
    %v495 = vpop.f32.mrb[0].mxu0
    %v496 = vadd.f32 %v101, %v495
    %v497 = vpop.f32.mrb[0].mxu0
    %498 = vdwg.mxu0
    %vm499 = vcmask 130048
    %v500 = vsel %vm499, %v491, -inf
    %501 = vmax.xlane.f32.xlu0 %v500
    %v502 = vpop.xlane.xlu0 %501
    %v503 = vsel %vm499, %v496, -inf
    %504 = vmax.xlane.f32.xlu0 %v503
    %v505 = vpop.xlane.xlu0 %504
    %v506 = vsub.f32 %v491, %v502
    %v507 = vsub.f32 %v496, %v505
    %v508 = vmul.f32 %v506, 1.442695
    %v509 = vpow.pop %v508
    %v510 = vmul.f32 %v507, 1.442695
    %v511 = vpow.pop %v510
    %v512 = vmul.f32 %v509, %v96
    %v513 = vmul.f32 %v511, %v97
    %v514 = vsel %vm499, %v512, 0.0
    %515 = vadd.xlane.f32.xlu0 %v514
    %v516 = vpop.xlane.xlu0 %515
    %v517 = vsel %vm499, %v513, 0.0
    %518 = vadd.xlane.f32.xlu0 %v517
    %v519 = vpop.xlane.xlu0 %518
    %v520 = vmax.f32 %v516, 1e-30
    %v521 = vmax.f32 %v519, 1e-30
    %v522 = vrcp.pop %v520
    %v523 = vrcp.pop %v521
    %v524 = vmul.f32 %v512, %v522
    %v525 = vmul.f32 %v513, %v523
    %526 = vrot.lane.b32.xlu0 %v402, 64
    %v527 = vpop.permute.xlu0 %526
    %528 = vrot.lane.b32.xlu0 %v407, 64
    %v529 = vpop.permute.xlu0 %528
    %532 = vrot.lane.b32.xlu0 %v402, 32
    %v533 = vpop.permute.xlu0 %532
    %534 = vrot.lane.b32.xlu0 %v407, 32
    %v535 = vpop.permute.xlu0 %534
    %v539 = vsel %vm499, %v524, 0
    %v542 = vsel %vm499, %v525, 0
    %544 = vmatprep.subr.mxu0 0.0
    %545 = vmatpush1.msra.mxu0 %v527
    %546 = vmatprep.subr.mxu0 0.0
    %547 = vmatpush1.msra.mxu0 %v529
    %548 = vmatprep.subr.mxu0 0.0
    %549 = vmatpush1.msra.mxu0 0.0
    %550 = vmatprep.subr.mxu0 0.0
    %551 = vmatpush1.msra.mxu0 0.0
    %552 = vmatprep.subr.mxu0 0.0
    %553 = vmatpush1.msra.mxu0 0.0
    %554 = vmatprep.subr.mxu0 0.0
    %555 = vmatpush1.msra.mxu0 0.0
    %556 = vmatprep.subr.mxu0 0.0
    %557 = vmatpush1.msra.mxu0 0.0
    %558 = vmatprep.subr.mxu0 0.0
    %559 = vmatpush1.msra.mxu0 0.0
    %560 = vmatprep.subr.mxu0 0.0
    %561 = vmatpush1.msra.mxu0 0.0
    %562 = vmatprep.subr.mxu0 0.0
    %563 = vmatpush1.msra.mxu0 0.0
    %564 = vmatprep.subr.mxu0 0.0
    %565 = vmatpush1.msra.mxu0 0.0
    %566 = vmatprep.subr.mxu0 0.0
    %567 = vmatpush1.msra.mxu0 0.0
    %568 = vmatprep.subr.mxu0 0.0
    %569 = vmatpush1.msra.mxu0 0.0
    %570 = vmatprep.subr.mxu0 0.0
    %571 = vmatpush1.msra.mxu0 0.0
    %572 = vmatprep.subr.mxu0 0.0
    %573 = vmatpush1.msra.mxu0 0.0
    %574 = vmatprep.subr.mxu0 0.0
    %575 = vmatpush1.msra.mxu0 0.0
    %576 = vmatprep.subr.mxu0 0.0
    %577 = vmatpush1.msra.mxu0 0.0
    %578 = vmatprep.subr.mxu0 0.0
    %579 = vmatpush1.msra.mxu0 0.0
    %580 = vmatprep.subr.mxu0 0.0
    %581 = vmatpush1.msra.mxu0 0.0
    %582 = vmatprep.subr.mxu0 0.0
    %583 = vmatpush1.msra.mxu0 0.0
    %584 = vmatprep.subr.mxu0 0.0
    %585 = vmatpush1.msra.mxu0 0.0
    %586 = vmatprep.subr.mxu0 0.0
    %587 = vmatpush1.msra.mxu0 0.0
    %588 = vmatprep.subr.mxu0 0.0
    %589 = vmatpush1.msra.mxu0 0.0
    %590 = vmatprep.subr.mxu0 0.0
    %591 = vmatpush1.msra.mxu0 0.0
    %592 = vmatprep.subr.mxu0 0.0
    %593 = vmatpush1.msra.mxu0 0.0
    %594 = vmatprep.subr.mxu0 0.0
    %595 = vmatpush1.msra.mxu0 0.0
    %596 = vmatprep.subr.mxu0 0.0
    %597 = vmatpush1.msra.mxu0 0.0
    %598 = vmatprep.subr.mxu0 0.0
    %599 = vmatpush1.msra.mxu0 0.0
    %600 = vmatprep.subr.mxu0 0.0
    %601 = vmatpush1.msra.mxu0 0.0
    %602 = vmatprep.subr.mxu0 0.0
    %603 = vmatpush1.msra.mxu0 0.0
    %604 = vmatprep.subr.mxu0 0.0
    %605 = vmatpush1.msra.mxu0 0.0
    %606 = vmatprep.subr.mxu0 0.0
    %607 = vmatpush1.msra.mxu0 0.0
    %608 = vmatprep.mubr.f32.mxu0 0.0
    %609 = vmatmul.mubr.f32.gmra.mrb[0].mxu0 %v539
    %v610 = vpop.f32.mrb[0].mxu0
    %v611 = vadd.f32 %v533, %v610
    %v612 = vpop.f32.mrb[0].mxu0
    %613 = vmatprep.mubr.f32.mxu0 0.0
    %614 = vmatmul.mubr.f32.gmra.mrb[0].mxu0 %v542
    %v615 = vpop.f32.mrb[0].mxu0
    %v616 = vadd.f32 %v535, %v615
    %v617 = vpop.f32.mrb[0].mxu0
    %618 = vdwg.mxu0
    %v619 = vmax.f32 %v611, 0.0
    %v620 = vmax.f32 %v616, 0.0
    %v621 = vld [vmem:[%s8] sm:$0xff]
    %v622 = vld [vmem:[%s8 + $0x8] sm:$0xff]
    %v623 = vld [vmem:[%s8 + $0x10] sm:$0xff]
    %v624 = vld [vmem:[%s8 + $0x18] sm:$0xff]
    %v625 = vld [vmem:[#allocation2] sm:$0x1]
    %v627 = vlaneseq
    %v628 = vshrl.u32 %v627, 7
    %v629 = vsub.s32 0, %v628
    %v630 = vrot.slane %v625, %v629
    %v633 = vsel %vm113, %v619, 0
    %v636 = vsel %vm113, %v620, 0
    %638 = vmatprep.subr.mxu0 0.0
    %639 = vmatpush1.msra.mxu0 %v621
    %640 = vmatprep.subr.mxu0 0.0
    %641 = vmatpush1.msra.mxu0 %v622
    %642 = vmatprep.subr.mxu0 0.0
    %643 = vmatpush1.msra.mxu0 %v623
    %644 = vmatprep.subr.mxu0 0.0
    %645 = vmatpush1.msra.mxu0 %v624
    %646 = vmatprep.subr.mxu0 0.0
    %647 = vmatpush1.msra.mxu0 0.0
    %648 = vmatprep.subr.mxu0 0.0
    %649 = vmatpush1.msra.mxu0 0.0
    %650 = vmatprep.subr.mxu0 0.0
    %651 = vmatpush1.msra.mxu0 0.0
    %652 = vmatprep.subr.mxu0 0.0
    %653 = vmatpush1.msra.mxu0 0.0
    %654 = vmatprep.subr.mxu0 0.0
    %655 = vmatpush1.msra.mxu0 0.0
    %656 = vmatprep.subr.mxu0 0.0
    %657 = vmatpush1.msra.mxu0 0.0
    %658 = vmatprep.subr.mxu0 0.0
    %659 = vmatpush1.msra.mxu0 0.0
    %660 = vmatprep.subr.mxu0 0.0
    %661 = vmatpush1.msra.mxu0 0.0
    %662 = vmatprep.subr.mxu0 0.0
    %663 = vmatpush1.msra.mxu0 0.0
    %664 = vmatprep.subr.mxu0 0.0
    %665 = vmatpush1.msra.mxu0 0.0
    %666 = vmatprep.subr.mxu0 0.0
    %667 = vmatpush1.msra.mxu0 0.0
    %668 = vmatprep.subr.mxu0 0.0
    %669 = vmatpush1.msra.mxu0 0.0
    %670 = vmatprep.subr.mxu0 0.0
    %671 = vmatpush1.msra.mxu0 0.0
    %672 = vmatprep.subr.mxu0 0.0
    %673 = vmatpush1.msra.mxu0 0.0
    %674 = vmatprep.subr.mxu0 0.0
    %675 = vmatpush1.msra.mxu0 0.0
    %676 = vmatprep.subr.mxu0 0.0
    %677 = vmatpush1.msra.mxu0 0.0
    %678 = vmatprep.subr.mxu0 0.0
    %679 = vmatpush1.msra.mxu0 0.0
    %680 = vmatprep.subr.mxu0 0.0
    %681 = vmatpush1.msra.mxu0 0.0
    %682 = vmatprep.subr.mxu0 0.0
    %683 = vmatpush1.msra.mxu0 0.0
    %684 = vmatprep.subr.mxu0 0.0
    %685 = vmatpush1.msra.mxu0 0.0
    %686 = vmatprep.subr.mxu0 0.0
    %687 = vmatpush1.msra.mxu0 0.0
    %688 = vmatprep.subr.mxu0 0.0
    %689 = vmatpush1.msra.mxu0 0.0
    %690 = vmatprep.subr.mxu0 0.0
    %691 = vmatpush1.msra.mxu0 0.0
    %692 = vmatprep.subr.mxu0 0.0
    %693 = vmatpush1.msra.mxu0 0.0
    %694 = vmatprep.subr.mxu0 0.0
    %695 = vmatpush1.msra.mxu0 0.0
    %696 = vmatprep.subr.mxu0 0.0
    %697 = vmatpush1.msra.mxu0 0.0
    %698 = vmatprep.subr.mxu0 0.0
    %699 = vmatpush1.msra.mxu0 0.0
    %700 = vmatprep.subr.mxu0 0.0
    %701 = vmatpush1.msra.mxu0 0.0
    %702 = vmatprep.mubr.f32.mxu0 0.0
    %703 = vmatmul.mubr.f32.gmra.mrb[0].mxu0 %v633
    %v704 = vpop.f32.mrb[0].mxu0
    %v705 = vadd.f32 %v630, %v704
    %v706 = vpop.f32.mrb[0].mxu0
    %707 = vmatprep.mubr.f32.mxu0 0.0
    %708 = vmatmul.mubr.f32.gmra.mrb[0].mxu0 %v636
    %v709 = vpop.f32.mrb[0].mxu0
    %v710 = vadd.f32 %v630, %v709
    %v711 = vpop.f32.mrb[0].mxu0
    %712 = vdwg.mxu0
    %715 = vrot.lane.b32.xlu0 %v705, 96
    %v716 = vpop.permute.xlu0 %715
    %717 = vrot.lane.b32.xlu0 %v710, 96
    %v718 = vpop.permute.xlu0 %717
    %v719 = vsel %vm113, %v705, 0
    %v721 = vsel %vm113, %v710, 0
    %v723 = vsel %vm113, %v716, 0
    %v725 = vsel %vm113, %v718, 0
    %727 = vmatprep.subr.mxu0 0.0
    %728 = vmatpush1.xpose.msra.mxu0 %v723
    %729 = vmatprep.subr.mxu0 0.0
    %730 = vmatpush1.xpose.msra.mxu0 %v725
    %731 = vmatprep.subr.mxu0 0.0
    %732 = vmatpush1.xpose.msra.mxu0 0.0
    %733 = vmatprep.subr.mxu0 0.0
    %734 = vmatpush1.xpose.msra.mxu0 0.0
    %735 = vmatprep.subr.mxu0 0.0
    %736 = vmatpush1.xpose.msra.mxu0 0.0
    %737 = vmatprep.subr.mxu0 0.0
    %738 = vmatpush1.xpose.msra.mxu0 0.0
    %739 = vmatprep.subr.mxu0 0.0
    %740 = vmatpush1.xpose.msra.mxu0 0.0
    %741 = vmatprep.subr.mxu0 0.0
    %742 = vmatpush1.xpose.msra.mxu0 0.0
    %743 = vmatprep.subr.mxu0 0.0
    %744 = vmatpush1.xpose.msra.mxu0 0.0
    %745 = vmatprep.subr.mxu0 0.0
    %746 = vmatpush1.xpose.msra.mxu0 0.0
    %747 = vmatprep.subr.mxu0 0.0
    %748 = vmatpush1.xpose.msra.mxu0 0.0
    %749 = vmatprep.subr.mxu0 0.0
    %750 = vmatpush1.xpose.msra.mxu0 0.0
    %751 = vmatprep.subr.mxu0 0.0
    %752 = vmatpush1.xpose.msra.mxu0 0.0
    %753 = vmatprep.subr.mxu0 0.0
    %754 = vmatpush1.xpose.msra.mxu0 0.0
    %755 = vmatprep.subr.mxu0 0.0
    %756 = vmatpush1.xpose.msra.mxu0 0.0
    %757 = vmatprep.subr.mxu0 0.0
    %758 = vmatpush1.xpose.msra.mxu0 0.0
    %759 = vmatprep.subr.mxu0 0.0
    %760 = vmatpush1.xpose.msra.mxu0 0.0
    %761 = vmatprep.subr.mxu0 0.0
    %762 = vmatpush1.xpose.msra.mxu0 0.0
    %763 = vmatprep.subr.mxu0 0.0
    %764 = vmatpush1.xpose.msra.mxu0 0.0
    %765 = vmatprep.subr.mxu0 0.0
    %766 = vmatpush1.xpose.msra.mxu0 0.0
    %767 = vmatprep.subr.mxu0 0.0
    %768 = vmatpush1.xpose.msra.mxu0 0.0
    %769 = vmatprep.subr.mxu0 0.0
    %770 = vmatpush1.xpose.msra.mxu0 0.0
    %771 = vmatprep.subr.mxu0 0.0
    %772 = vmatpush1.xpose.msra.mxu0 0.0
    %773 = vmatprep.subr.mxu0 0.0
    %774 = vmatpush1.xpose.msra.mxu0 0.0
    %775 = vmatprep.subr.mxu0 0.0
    %776 = vmatpush1.xpose.msra.mxu0 0.0
    %777 = vmatprep.subr.mxu0 0.0
    %778 = vmatpush1.xpose.msra.mxu0 0.0
    %779 = vmatprep.subr.mxu0 0.0
    %780 = vmatpush1.xpose.msra.mxu0 0.0
    %781 = vmatprep.subr.mxu0 0.0
    %782 = vmatpush1.xpose.msra.mxu0 0.0
    %783 = vmatprep.subr.mxu0 0.0
    %784 = vmatpush1.xpose.msra.mxu0 0.0
    %785 = vmatprep.subr.mxu0 0.0
    %786 = vmatpush1.xpose.msra.mxu0 0.0
    %787 = vmatprep.subr.mxu0 0.0
    %788 = vmatpush1.xpose.msra.mxu0 0.0
    %789 = vmatprep.subr.mxu0 0.0
    %790 = vmatpush1.xpose.msra.mxu0 0.0
    %791 = vmatprep.mubr.f32.mxu0 0.0
    %792 = vmatmul.mubr.f32.gmra.mrb[0].mxu0 %v719
    %v793 = vpop.f32.mrb[0].mxu0
    %v794 = vadd.f32 %v100, %v793
    %v795 = vpop.f32.mrb[0].mxu0
    %796 = vmatprep.mubr.f32.mxu0 0.0
    %797 = vmatmul.mubr.f32.gmra.mrb[0].mxu0 %v721
    %v798 = vpop.f32.mrb[0].mxu0
    %v799 = vadd.f32 %v101, %v798
    %v800 = vpop.f32.mrb[0].mxu0
    %801 = vdwg.mxu0
    %v802 = vsel %vm499, %v794, -inf
    %803 = vmax.xlane.f32.xlu0 %v802
    %v804 = vpop.xlane.xlu0 %803
    %v805 = vsel %vm499, %v799, -inf
    %806 = vmax.xlane.f32.xlu0 %v805
    %v807 = vpop.xlane.xlu0 %806
    %v808 = vsub.f32 %v794, %v804
    %v809 = vsub.f32 %v799, %v807
    %v810 = vmul.f32 %v808, 1.442695
    %v811 = vpow.pop %v810
    %v812 = vmul.f32 %v809, 1.442695
    %v813 = vpow.pop %v812
    %v814 = vmul.f32 %v811, %v96
    %v815 = vmul.f32 %v813, %v97
    %v816 = vsel %vm499, %v814, 0.0
    %817 = vadd.xlane.f32.xlu0 %v816
    %v818 = vpop.xlane.xlu0 %817
    %v819 = vsel %vm499, %v815, 0.0
    %820 = vadd.xlane.f32.xlu0 %v819
    %v821 = vpop.xlane.xlu0 %820
    %v822 = vmax.f32 %v818, 1e-30
    %v823 = vmax.f32 %v821, 1e-30
    %v824 = vrcp.pop %v822
    %v825 = vrcp.pop %v823
    %v826 = vmul.f32 %v814, %v824
    %v827 = vmul.f32 %v815, %v825
    %828 = vrot.lane.b32.xlu0 %v705, 64
    %v829 = vpop.permute.xlu0 %828
    %830 = vrot.lane.b32.xlu0 %v710, 64
    %v831 = vpop.permute.xlu0 %830
    %834 = vrot.lane.b32.xlu0 %v705, 32
    %v835 = vpop.permute.xlu0 %834
    %836 = vrot.lane.b32.xlu0 %v710, 32
    %v837 = vpop.permute.xlu0 %836
    %v841 = vsel %vm499, %v826, 0
    %v844 = vsel %vm499, %v827, 0
    %846 = vmatprep.subr.mxu0 0.0
    %847 = vmatpush1.msra.mxu0 %v829
    %848 = vmatprep.subr.mxu0 0.0
    %849 = vmatpush1.msra.mxu0 %v831
    %850 = vmatprep.subr.mxu0 0.0
    %851 = vmatpush1.msra.mxu0 0.0
    %852 = vmatprep.subr.mxu0 0.0
    %853 = vmatpush1.msra.mxu0 0.0
    %854 = vmatprep.subr.mxu0 0.0
    %855 = vmatpush1.msra.mxu0 0.0
    %856 = vmatprep.subr.mxu0 0.0
    %857 = vmatpush1.msra.mxu0 0.0
    %858 = vmatprep.subr.mxu0 0.0
    %859 = vmatpush1.msra.mxu0 0.0
    %860 = vmatprep.subr.mxu0 0.0
    %861 = vmatpush1.msra.mxu0 0.0
    %862 = vmatprep.subr.mxu0 0.0
    %863 = vmatpush1.msra.mxu0 0.0
    %864 = vmatprep.subr.mxu0 0.0
    %865 = vmatpush1.msra.mxu0 0.0
    %866 = vmatprep.subr.mxu0 0.0
    %867 = vmatpush1.msra.mxu0 0.0
    %868 = vmatprep.subr.mxu0 0.0
    %869 = vmatpush1.msra.mxu0 0.0
    %870 = vmatprep.subr.mxu0 0.0
    %871 = vmatpush1.msra.mxu0 0.0
    %872 = vmatprep.subr.mxu0 0.0
    %873 = vmatpush1.msra.mxu0 0.0
    %874 = vmatprep.subr.mxu0 0.0
    %875 = vmatpush1.msra.mxu0 0.0
    %876 = vmatprep.subr.mxu0 0.0
    %877 = vmatpush1.msra.mxu0 0.0
    %878 = vmatprep.subr.mxu0 0.0
    %879 = vmatpush1.msra.mxu0 0.0
    %880 = vmatprep.subr.mxu0 0.0
    %881 = vmatpush1.msra.mxu0 0.0
    %882 = vmatprep.subr.mxu0 0.0
    %883 = vmatpush1.msra.mxu0 0.0
    %884 = vmatprep.subr.mxu0 0.0
    %885 = vmatpush1.msra.mxu0 0.0
    %886 = vmatprep.subr.mxu0 0.0
    %887 = vmatpush1.msra.mxu0 0.0
    %888 = vmatprep.subr.mxu0 0.0
    %889 = vmatpush1.msra.mxu0 0.0
    %890 = vmatprep.subr.mxu0 0.0
    %891 = vmatpush1.msra.mxu0 0.0
    %892 = vmatprep.subr.mxu0 0.0
    %893 = vmatpush1.msra.mxu0 0.0
    %894 = vmatprep.subr.mxu0 0.0
    %895 = vmatpush1.msra.mxu0 0.0
    %896 = vmatprep.subr.mxu0 0.0
    %897 = vmatpush1.msra.mxu0 0.0
    %898 = vmatprep.subr.mxu0 0.0
    %899 = vmatpush1.msra.mxu0 0.0
    %900 = vmatprep.subr.mxu0 0.0
    %901 = vmatpush1.msra.mxu0 0.0
    %902 = vmatprep.subr.mxu0 0.0
    %903 = vmatpush1.msra.mxu0 0.0
    %904 = vmatprep.subr.mxu0 0.0
    %905 = vmatpush1.msra.mxu0 0.0
    %906 = vmatprep.subr.mxu0 0.0
    %907 = vmatpush1.msra.mxu0 0.0
    %908 = vmatprep.subr.mxu0 0.0
    %909 = vmatpush1.msra.mxu0 0.0
    %910 = vmatprep.mubr.f32.mxu0 0.0
    %911 = vmatmul.mubr.f32.gmra.mrb[0].mxu0 %v841
    %v912 = vpop.f32.mrb[0].mxu0
    %v913 = vadd.f32 %v835, %v912
    %v914 = vpop.f32.mrb[0].mxu0
    %915 = vmatprep.mubr.f32.mxu0 0.0
    %916 = vmatmul.mubr.f32.gmra.mrb[0].mxu0 %v844
    %v917 = vpop.f32.mrb[0].mxu0
    %v918 = vadd.f32 %v837, %v917
    %v919 = vpop.f32.mrb[0].mxu0
    %920 = vdwg.mxu0
    %v921 = vmax.f32 %v913, 0.0
    %v922 = vmax.f32 %v918, 0.0
    %v923 = vld [vmem:[%s10] sm:$0xff]
    %v924 = vld [vmem:[%s10 + $0x8] sm:$0xff]
    %v925 = vld [vmem:[%s10 + $0x10] sm:$0xff]
    %v926 = vld [vmem:[%s10 + $0x18] sm:$0xff]
    %v927 = vld [vmem:[%s11] sm:$0x1]
    %v929 = vlaneseq
    %v930 = vshrl.u32 %v929, 7
    %v931 = vsub.s32 0, %v930
    %v932 = vrot.slane %v927, %v931
    %v935 = vsel %vm113, %v921, 0
    %v938 = vsel %vm113, %v922, 0
    %940 = vmatprep.subr.mxu0 0.0
    %941 = vmatpush1.msra.mxu0 %v923
    %942 = vmatprep.subr.mxu0 0.0
    %943 = vmatpush1.msra.mxu0 %v924
    %944 = vmatprep.subr.mxu0 0.0
    %945 = vmatpush1.msra.mxu0 %v925
    %946 = vmatprep.subr.mxu0 0.0
    %947 = vmatpush1.msra.mxu0 %v926
    %948 = vmatprep.subr.mxu0 0.0
    %949 = vmatpush1.msra.mxu0 0.0
    %950 = vmatprep.subr.mxu0 0.0
    %951 = vmatpush1.msra.mxu0 0.0
    %952 = vmatprep.subr.mxu0 0.0
    %953 = vmatpush1.msra.mxu0 0.0
    %954 = vmatprep.subr.mxu0 0.0
    %955 = vmatpush1.msra.mxu0 0.0
    %956 = vmatprep.subr.mxu0 0.0
    %957 = vmatpush1.msra.mxu0 0.0
    %958 = vmatprep.subr.mxu0 0.0
    %959 = vmatpush1.msra.mxu0 0.0
    %960 = vmatprep.subr.mxu0 0.0
    %961 = vmatpush1.msra.mxu0 0.0
    %962 = vmatprep.subr.mxu0 0.0
    %963 = vmatpush1.msra.mxu0 0.0
    %964 = vmatprep.subr.mxu0 0.0
    %965 = vmatpush1.msra.mxu0 0.0
    %966 = vmatprep.subr.mxu0 0.0
    %967 = vmatpush1.msra.mxu0 0.0
    %968 = vmatprep.subr.mxu0 0.0
    %969 = vmatpush1.msra.mxu0 0.0
    %970 = vmatprep.subr.mxu0 0.0
    %971 = vmatpush1.msra.mxu0 0.0
    %972 = vmatprep.subr.mxu0 0.0
    %973 = vmatpush1.msra.mxu0 0.0
    %974 = vmatprep.subr.mxu0 0.0
    %975 = vmatpush1.msra.mxu0 0.0
    %976 = vmatprep.subr.mxu0 0.0
    %977 = vmatpush1.msra.mxu0 0.0
    %978 = vmatprep.subr.mxu0 0.0
    %979 = vmatpush1.msra.mxu0 0.0
    %980 = vmatprep.subr.mxu0 0.0
    %981 = vmatpush1.msra.mxu0 0.0
    %982 = vmatprep.subr.mxu0 0.0
    %983 = vmatpush1.msra.mxu0 0.0
    %984 = vmatprep.subr.mxu0 0.0
    %985 = vmatpush1.msra.mxu0 0.0
    %986 = vmatprep.subr.mxu0 0.0
    %987 = vmatpush1.msra.mxu0 0.0
    %988 = vmatprep.subr.mxu0 0.0
    %989 = vmatpush1.msra.mxu0 0.0
    %990 = vmatprep.subr.mxu0 0.0
    %991 = vmatpush1.msra.mxu0 0.0
    %992 = vmatprep.subr.mxu0 0.0
    %993 = vmatpush1.msra.mxu0 0.0
    %994 = vmatprep.subr.mxu0 0.0
    %995 = vmatpush1.msra.mxu0 0.0
    %996 = vmatprep.subr.mxu0 0.0
    %997 = vmatpush1.msra.mxu0 0.0
    %998 = vmatprep.subr.mxu0 0.0
    %999 = vmatpush1.msra.mxu0 0.0
    %1000 = vmatprep.subr.mxu0 0.0
    %1001 = vmatpush1.msra.mxu0 0.0
    %1002 = vmatprep.subr.mxu0 0.0
    %1003 = vmatpush1.msra.mxu0 0.0
    %1004 = vmatprep.mubr.f32.mxu0 0.0
    %1005 = vmatmul.mubr.f32.gmra.mrb[0].mxu0 %v935
    %v1006 = vpop.f32.mrb[0].mxu0
    %v1007 = vadd.f32 %v932, %v1006
    %v1008 = vpop.f32.mrb[0].mxu0
    %1009 = vmatprep.mubr.f32.mxu0 0.0
    %1010 = vmatmul.mubr.f32.gmra.mrb[0].mxu0 %v938
    %v1011 = vpop.f32.mrb[0].mxu0
    %v1012 = vadd.f32 %v932, %v1011
    %v1013 = vpop.f32.mrb[0].mxu0
    %1014 = vdwg.mxu0
    %1017 = vrot.lane.b32.xlu0 %v1007, 112
    %v1018 = vpop.permute.xlu0 %1017
    %1019 = vrot.lane.b32.xlu0 %v1012, 112
    %v1020 = vpop.permute.xlu0 %1019
    %v1021 = vsel %vm499, %v1007, 0
    %v1023 = vsel %vm499, %v1012, 0
    %v1025 = vsel %vm499, %v1018, 0
    %v1027 = vsel %vm499, %v1020, 0
    %1029 = vmatprep.subr.mxu0 0.0
    %1030 = vmatpush1.xpose.msra.mxu0 %v1025
    %1031 = vmatprep.subr.mxu0 0.0
    %1032 = vmatpush1.xpose.msra.mxu0 %v1027
    %1033 = vmatprep.subr.mxu0 0.0
    %1034 = vmatpush1.xpose.msra.mxu0 0.0
    %1035 = vmatprep.subr.mxu0 0.0
    %1036 = vmatpush1.xpose.msra.mxu0 0.0
    %1037 = vmatprep.subr.mxu0 0.0
    %1038 = vmatpush1.xpose.msra.mxu0 0.0
    %1039 = vmatprep.subr.mxu0 0.0
    %1040 = vmatpush1.xpose.msra.mxu0 0.0
    %1041 = vmatprep.subr.mxu0 0.0
    %1042 = vmatpush1.xpose.msra.mxu0 0.0
    %1043 = vmatprep.subr.mxu0 0.0
    %1044 = vmatpush1.xpose.msra.mxu0 0.0
    %1045 = vmatprep.subr.mxu0 0.0
    %1046 = vmatpush1.xpose.msra.mxu0 0.0
    %1047 = vmatprep.subr.mxu0 0.0
    %1048 = vmatpush1.xpose.msra.mxu0 0.0
    %1049 = vmatprep.subr.mxu0 0.0
    %1050 = vmatpush1.xpose.msra.mxu0 0.0
    %1051 = vmatprep.subr.mxu0 0.0
    %1052 = vmatpush1.xpose.msra.mxu0 0.0
    %1053 = vmatprep.subr.mxu0 0.0
    %1054 = vmatpush1.xpose.msra.mxu0 0.0
    %1055 = vmatprep.subr.mxu0 0.0
    %1056 = vmatpush1.xpose.msra.mxu0 0.0
    %1057 = vmatprep.subr.mxu0 0.0
    %1058 = vmatpush1.xpose.msra.mxu0 0.0
    %1059 = vmatprep.subr.mxu0 0.0
    %1060 = vmatpush1.xpose.msra.mxu0 0.0
    %1061 = vmatprep.subr.mxu0 0.0
    %1062 = vmatpush1.xpose.msra.mxu0 0.0
    %1063 = vmatprep.subr.mxu0 0.0
    %1064 = vmatpush1.xpose.msra.mxu0 0.0
    %1065 = vmatprep.subr.mxu0 0.0
    %1066 = vmatpush1.xpose.msra.mxu0 0.0
    %1067 = vmatprep.subr.mxu0 0.0
    %1068 = vmatpush1.xpose.msra.mxu0 0.0
    %1069 = vmatprep.subr.mxu0 0.0
    %1070 = vmatpush1.xpose.msra.mxu0 0.0
    %1071 = vmatprep.subr.mxu0 0.0
    %1072 = vmatpush1.xpose.msra.mxu0 0.0
    %1073 = vmatprep.subr.mxu0 0.0
    %1074 = vmatpush1.xpose.msra.mxu0 0.0
    %1075 = vmatprep.subr.mxu0 0.0
    %1076 = vmatpush1.xpose.msra.mxu0 0.0
    %1077 = vmatprep.subr.mxu0 0.0
    %1078 = vmatpush1.xpose.msra.mxu0 0.0
    %1079 = vmatprep.subr.mxu0 0.0
    %1080 = vmatpush1.xpose.msra.mxu0 0.0
    %1081 = vmatprep.subr.mxu0 0.0
    %1082 = vmatpush1.xpose.msra.mxu0 0.0
    %1083 = vmatprep.subr.mxu0 0.0
    %1084 = vmatpush1.xpose.msra.mxu0 0.0
    %1085 = vmatprep.subr.mxu0 0.0
    %1086 = vmatpush1.xpose.msra.mxu0 0.0
    %1087 = vmatprep.subr.mxu0 0.0
    %1088 = vmatpush1.xpose.msra.mxu0 0.0
    %1089 = vmatprep.subr.mxu0 0.0
    %1090 = vmatpush1.xpose.msra.mxu0 0.0
    %1091 = vmatprep.subr.mxu0 0.0
    %1092 = vmatpush1.xpose.msra.mxu0 0.0
    %1093 = vmatprep.mubr.f32.mxu0 0.0
    %1094 = vmatmul.mubr.f32.gmra.mrb[0].mxu0 %v1021
    %v1095 = vpop.f32.mrb[0].mxu0
    %v1096 = vadd.f32 %v100, %v1095
    %v1097 = vpop.f32.mrb[0].mxu0
    %1098 = vmatprep.mubr.f32.mxu0 0.0
    %1099 = vmatmul.mubr.f32.gmra.mrb[0].mxu0 %v1023
    %v1100 = vpop.f32.mrb[0].mxu0
    %v1101 = vadd.f32 %v101, %v1100
    %v1102 = vpop.f32.mrb[0].mxu0
    %1103 = vdwg.mxu0
    %v1104 = vsel %vm499, %v1096, -inf
    %1105 = vmax.xlane.f32.xlu0 %v1104
    %v1106 = vpop.xlane.xlu0 %1105
    %v1107 = vsel %vm499, %v1101, -inf
    %1108 = vmax.xlane.f32.xlu0 %v1107
    %v1109 = vpop.xlane.xlu0 %1108
    %v1110 = vsub.f32 %v1096, %v1106
    %v1111 = vsub.f32 %v1101, %v1109
    %v1112 = vmul.f32 %v1110, 1.442695
    %v1113 = vpow.pop %v1112
    %v1114 = vmul.f32 %v1111, 1.442695
    %v1115 = vpow.pop %v1114
    %v1116 = vmul.f32 %v1113, %v96
    %v1117 = vmul.f32 %v1115, %v97
    %v1118 = vsel %vm499, %v1116, 0.0
    %1119 = vadd.xlane.f32.xlu0 %v1118
    %v1120 = vpop.xlane.xlu0 %1119
    %v1121 = vsel %vm499, %v1117, 0.0
    %1122 = vadd.xlane.f32.xlu0 %v1121
    %v1123 = vpop.xlane.xlu0 %1122
    %v1124 = vmax.f32 %v1120, 1e-30
    %v1125 = vmax.f32 %v1123, 1e-30
    %v1126 = vrcp.pop %v1124
    %v1127 = vrcp.pop %v1125
    %v1128 = vmul.f32 %v1116, %v1126
    %v1129 = vmul.f32 %v1117, %v1127
    %1130 = vrot.lane.b32.xlu0 %v1007, 96
    %v1131 = vpop.permute.xlu0 %1130
    %1132 = vrot.lane.b32.xlu0 %v1012, 96
    %v1133 = vpop.permute.xlu0 %1132
    %1136 = vrot.lane.b32.xlu0 %v1007, 80
    %v1137 = vpop.permute.xlu0 %1136
    %1138 = vrot.lane.b32.xlu0 %v1012, 80
    %v1139 = vpop.permute.xlu0 %1138
    %v1143 = vsel %vm499, %v1128, 0
    %v1146 = vsel %vm499, %v1129, 0
    %1148 = vmatprep.subr.mxu0 0.0
    %1149 = vmatpush1.msra.mxu0 %v1131
    %1150 = vmatprep.subr.mxu0 0.0
    %1151 = vmatpush1.msra.mxu0 %v1133
    %1152 = vmatprep.subr.mxu0 0.0
    %1153 = vmatpush1.msra.mxu0 0.0
    %1154 = vmatprep.subr.mxu0 0.0
    %1155 = vmatpush1.msra.mxu0 0.0
    %1156 = vmatprep.subr.mxu0 0.0
    %1157 = vmatpush1.msra.mxu0 0.0
    %1158 = vmatprep.subr.mxu0 0.0
    %1159 = vmatpush1.msra.mxu0 0.0
    %1160 = vmatprep.subr.mxu0 0.0
    %1161 = vmatpush1.msra.mxu0 0.0
    %1162 = vmatprep.subr.mxu0 0.0
    %1163 = vmatpush1.msra.mxu0 0.0
    %1164 = vmatprep.subr.mxu0 0.0
    %1165 = vmatpush1.msra.mxu0 0.0
    %1166 = vmatprep.subr.mxu0 0.0
    %1167 = vmatpush1.msra.mxu0 0.0
    %1168 = vmatprep.subr.mxu0 0.0
    %1169 = vmatpush1.msra.mxu0 0.0
    %1170 = vmatprep.subr.mxu0 0.0
    %1171 = vmatpush1.msra.mxu0 0.0
    %1172 = vmatprep.subr.mxu0 0.0
    %1173 = vmatpush1.msra.mxu0 0.0
    %1174 = vmatprep.subr.mxu0 0.0
    %1175 = vmatpush1.msra.mxu0 0.0
    %1176 = vmatprep.subr.mxu0 0.0
    %1177 = vmatpush1.msra.mxu0 0.0
    %1178 = vmatprep.subr.mxu0 0.0
    %1179 = vmatpush1.msra.mxu0 0.0
    %1180 = vmatprep.subr.mxu0 0.0
    %1181 = vmatpush1.msra.mxu0 0.0
    %1182 = vmatprep.subr.mxu0 0.0
    %1183 = vmatpush1.msra.mxu0 0.0
    %1184 = vmatprep.subr.mxu0 0.0
    %1185 = vmatpush1.msra.mxu0 0.0
    %1186 = vmatprep.subr.mxu0 0.0
    %1187 = vmatpush1.msra.mxu0 0.0
    %1188 = vmatprep.subr.mxu0 0.0
    %1189 = vmatpush1.msra.mxu0 0.0
    %1190 = vmatprep.subr.mxu0 0.0
    %1191 = vmatpush1.msra.mxu0 0.0
    %1192 = vmatprep.subr.mxu0 0.0
    %1193 = vmatpush1.msra.mxu0 0.0
    %1194 = vmatprep.subr.mxu0 0.0
    %1195 = vmatpush1.msra.mxu0 0.0
    %1196 = vmatprep.subr.mxu0 0.0
    %1197 = vmatpush1.msra.mxu0 0.0
    %1198 = vmatprep.subr.mxu0 0.0
    %1199 = vmatpush1.msra.mxu0 0.0
    %1200 = vmatprep.subr.mxu0 0.0
    %1201 = vmatpush1.msra.mxu0 0.0
    %1202 = vmatprep.subr.mxu0 0.0
    %1203 = vmatpush1.msra.mxu0 0.0
    %1204 = vmatprep.subr.mxu0 0.0
    %1205 = vmatpush1.msra.mxu0 0.0
    %1206 = vmatprep.subr.mxu0 0.0
    %1207 = vmatpush1.msra.mxu0 0.0
    %1208 = vmatprep.subr.mxu0 0.0
    %1209 = vmatpush1.msra.mxu0 0.0
    %1210 = vmatprep.subr.mxu0 0.0
    %1211 = vmatpush1.msra.mxu0 0.0
    %1212 = vmatprep.mubr.f32.mxu0 0.0
    %1213 = vmatmul.mubr.f32.gmra.mrb[0].mxu0 %v1143
    %v1214 = vpop.f32.mrb[0].mxu0
    %v1215 = vadd.f32 %v1137, %v1214
    %v1216 = vpop.f32.mrb[0].mxu0
    %1217 = vmatprep.mubr.f32.mxu0 0.0
    %1218 = vmatmul.mubr.f32.gmra.mrb[0].mxu0 %v1146
    %v1219 = vpop.f32.mrb[0].mxu0
    %v1220 = vadd.f32 %v1139, %v1219
    %v1221 = vpop.f32.mrb[0].mxu0
    %1222 = vdwg.mxu0
    %1223 = vrot.lane.b32.xlu0 %v1007, 64
    %v1224 = vpop.permute.xlu0 %1223
    %1225 = vrot.lane.b32.xlu0 %v1012, 64
    %v1226 = vpop.permute.xlu0 %1225
    %1227 = vrot.lane.b32.xlu0 %v1007, 48
    %v1228 = vpop.permute.xlu0 %1227
    %1229 = vrot.lane.b32.xlu0 %v1012, 48
    %v1230 = vpop.permute.xlu0 %1229
    %v1231 = vsel %vm499, %v1224, 0
    %v1233 = vsel %vm499, %v1226, 0
    %v1235 = vsel %vm499, %v1228, 0
    %v1237 = vsel %vm499, %v1230, 0
    %1239 = vmatprep.subr.mxu0 0.0
    %1240 = vmatpush1.xpose.msra.mxu0 %v1235
    %1241 = vmatprep.subr.mxu0 0.0
    %1242 = vmatpush1.xpose.msra.mxu0 %v1237
    %1243 = vmatprep.subr.mxu0 0.0
    %1244 = vmatpush1.xpose.msra.mxu0 0.0
    %1245 = vmatprep.subr.mxu0 0.0
    %1246 = vmatpush1.xpose.msra.mxu0 0.0
    %1247 = vmatprep.subr.mxu0 0.0
    %1248 = vmatpush1.xpose.msra.mxu0 0.0
    %1249 = vmatprep.subr.mxu0 0.0
    %1250 = vmatpush1.xpose.msra.mxu0 0.0
    %1251 = vmatprep.subr.mxu0 0.0
    %1252 = vmatpush1.xpose.msra.mxu0 0.0
    %1253 = vmatprep.subr.mxu0 0.0
    %1254 = vmatpush1.xpose.msra.mxu0 0.0
    %1255 = vmatprep.subr.mxu0 0.0
    %1256 = vmatpush1.xpose.msra.mxu0 0.0
    %1257 = vmatprep.subr.mxu0 0.0
    %1258 = vmatpush1.xpose.msra.mxu0 0.0
    %1259 = vmatprep.subr.mxu0 0.0
    %1260 = vmatpush1.xpose.msra.mxu0 0.0
    %1261 = vmatprep.subr.mxu0 0.0
    %1262 = vmatpush1.xpose.msra.mxu0 0.0
    %1263 = vmatprep.subr.mxu0 0.0
    %1264 = vmatpush1.xpose.msra.mxu0 0.0
    %1265 = vmatprep.subr.mxu0 0.0
    %1266 = vmatpush1.xpose.msra.mxu0 0.0
    %1267 = vmatprep.subr.mxu0 0.0
    %1268 = vmatpush1.xpose.msra.mxu0 0.0
    %1269 = vmatprep.subr.mxu0 0.0
    %1270 = vmatpush1.xpose.msra.mxu0 0.0
    %1271 = vmatprep.subr.mxu0 0.0
    %1272 = vmatpush1.xpose.msra.mxu0 0.0
    %1273 = vmatprep.subr.mxu0 0.0
    %1274 = vmatpush1.xpose.msra.mxu0 0.0
    %1275 = vmatprep.subr.mxu0 0.0
    %1276 = vmatpush1.xpose.msra.mxu0 0.0
    %1277 = vmatprep.subr.mxu0 0.0
    %1278 = vmatpush1.xpose.msra.mxu0 0.0
    %1279 = vmatprep.subr.mxu0 0.0
    %1280 = vmatpush1.xpose.msra.mxu0 0.0
    %1281 = vmatprep.subr.mxu0 0.0
    %1282 = vmatpush1.xpose.msra.mxu0 0.0
    %1283 = vmatprep.subr.mxu0 0.0
    %1284 = vmatpush1.xpose.msra.mxu0 0.0
    %1285 = vmatprep.subr.mxu0 0.0
    %1286 = vmatpush1.xpose.msra.mxu0 0.0
    %1287 = vmatprep.subr.mxu0 0.0
    %1288 = vmatpush1.xpose.msra.mxu0 0.0
    %1289 = vmatprep.subr.mxu0 0.0
    %1290 = vmatpush1.xpose.msra.mxu0 0.0
    %1291 = vmatprep.subr.mxu0 0.0
    %1292 = vmatpush1.xpose.msra.mxu0 0.0
    %1293 = vmatprep.subr.mxu0 0.0
    %1294 = vmatpush1.xpose.msra.mxu0 0.0
    %1295 = vmatprep.subr.mxu0 0.0
    %1296 = vmatpush1.xpose.msra.mxu0 0.0
    %1297 = vmatprep.subr.mxu0 0.0
    %1298 = vmatpush1.xpose.msra.mxu0 0.0
    %1299 = vmatprep.subr.mxu0 0.0
    %1300 = vmatpush1.xpose.msra.mxu0 0.0
    %1301 = vmatprep.subr.mxu0 0.0
    %1302 = vmatpush1.xpose.msra.mxu0 0.0
    %1303 = vmatprep.mubr.f32.mxu0 0.0
    %1304 = vmatmul.mubr.f32.gmra.mrb[0].mxu0 %v1231
    %v1305 = vpop.f32.mrb[0].mxu0
    %v1306 = vadd.f32 %v100, %v1305
    %v1307 = vpop.f32.mrb[0].mxu0
    %1308 = vmatprep.mubr.f32.mxu0 0.0
    %1309 = vmatmul.mubr.f32.gmra.mrb[0].mxu0 %v1233
    %v1310 = vpop.f32.mrb[0].mxu0
    %v1311 = vadd.f32 %v101, %v1310
    %v1312 = vpop.f32.mrb[0].mxu0
    %1313 = vdwg.mxu0
    %v1314 = vsel %vm499, %v1306, -inf
    %1315 = vmax.xlane.f32.xlu0 %v1314
    %v1316 = vpop.xlane.xlu0 %1315
    %v1317 = vsel %vm499, %v1311, -inf
    %1318 = vmax.xlane.f32.xlu0 %v1317
    %v1319 = vpop.xlane.xlu0 %1318
    %v1320 = vsub.f32 %v1306, %v1316
    %v1321 = vsub.f32 %v1311, %v1319
    %v1322 = vmul.f32 %v1320, 1.442695
    %v1323 = vpow.pop %v1322
    %v1324 = vmul.f32 %v1321, 1.442695
    %v1325 = vpow.pop %v1324
    %v1326 = vmul.f32 %v1323, %v96
    %v1327 = vmul.f32 %v1325, %v97
    %v1328 = vsel %vm499, %v1326, 0.0
    %1329 = vadd.xlane.f32.xlu0 %v1328
    %v1330 = vpop.xlane.xlu0 %1329
    %v1331 = vsel %vm499, %v1327, 0.0
    %1332 = vadd.xlane.f32.xlu0 %v1331
    %v1333 = vpop.xlane.xlu0 %1332
    %v1334 = vmax.f32 %v1330, 1e-30
    %v1335 = vmax.f32 %v1333, 1e-30
    %v1336 = vrcp.pop %v1334
    %v1337 = vrcp.pop %v1335
    %v1338 = vmul.f32 %v1326, %v1336
    %v1339 = vmul.f32 %v1327, %v1337
    %1340 = vrot.lane.b32.xlu0 %v1007, 32
    %v1341 = vpop.permute.xlu0 %1340
    %1342 = vrot.lane.b32.xlu0 %v1012, 32
    %v1343 = vpop.permute.xlu0 %1342
    %1346 = vrot.lane.b32.xlu0 %v1007, 16
    %v1347 = vpop.permute.xlu0 %1346
    %1348 = vrot.lane.b32.xlu0 %v1012, 16
    %v1349 = vpop.permute.xlu0 %1348
    %v1353 = vsel %vm499, %v1338, 0
    %v1356 = vsel %vm499, %v1339, 0
    %1358 = vmatprep.subr.mxu0 0.0
    %1359 = vmatpush1.msra.mxu0 %v1341
    %1360 = vmatprep.subr.mxu0 0.0
    %1361 = vmatpush1.msra.mxu0 %v1343
    %1362 = vmatprep.subr.mxu0 0.0
    %1363 = vmatpush1.msra.mxu0 0.0
    %1364 = vmatprep.subr.mxu0 0.0
    %1365 = vmatpush1.msra.mxu0 0.0
    %1366 = vmatprep.subr.mxu0 0.0
    %1367 = vmatpush1.msra.mxu0 0.0
    %1368 = vmatprep.subr.mxu0 0.0
    %1369 = vmatpush1.msra.mxu0 0.0
    %1370 = vmatprep.subr.mxu0 0.0
    %1371 = vmatpush1.msra.mxu0 0.0
    %1372 = vmatprep.subr.mxu0 0.0
    %1373 = vmatpush1.msra.mxu0 0.0
    %1374 = vmatprep.subr.mxu0 0.0
    %1375 = vmatpush1.msra.mxu0 0.0
    %1376 = vmatprep.subr.mxu0 0.0
    %1377 = vmatpush1.msra.mxu0 0.0
    %1378 = vmatprep.subr.mxu0 0.0
    %1379 = vmatpush1.msra.mxu0 0.0
    %1380 = vmatprep.subr.mxu0 0.0
    %1381 = vmatpush1.msra.mxu0 0.0
    %1382 = vmatprep.subr.mxu0 0.0
    %1383 = vmatpush1.msra.mxu0 0.0
    %1384 = vmatprep.subr.mxu0 0.0
    %1385 = vmatpush1.msra.mxu0 0.0
    %1386 = vmatprep.subr.mxu0 0.0
    %1387 = vmatpush1.msra.mxu0 0.0
    %1388 = vmatprep.subr.mxu0 0.0
    %1389 = vmatpush1.msra.mxu0 0.0
    %1390 = vmatprep.subr.mxu0 0.0
    %1391 = vmatpush1.msra.mxu0 0.0
    %1392 = vmatprep.subr.mxu0 0.0
    %1393 = vmatpush1.msra.mxu0 0.0
    %1394 = vmatprep.subr.mxu0 0.0
    %1395 = vmatpush1.msra.mxu0 0.0
    %1396 = vmatprep.subr.mxu0 0.0
    %1397 = vmatpush1.msra.mxu0 0.0
    %1398 = vmatprep.subr.mxu0 0.0
    %1399 = vmatpush1.msra.mxu0 0.0
    %1400 = vmatprep.subr.mxu0 0.0
    %1401 = vmatpush1.msra.mxu0 0.0
    %1402 = vmatprep.subr.mxu0 0.0
    %1403 = vmatpush1.msra.mxu0 0.0
    %1404 = vmatprep.subr.mxu0 0.0
    %1405 = vmatpush1.msra.mxu0 0.0
    %1406 = vmatprep.subr.mxu0 0.0
    %1407 = vmatpush1.msra.mxu0 0.0
    %1408 = vmatprep.subr.mxu0 0.0
    %1409 = vmatpush1.msra.mxu0 0.0
    %1410 = vmatprep.subr.mxu0 0.0
    %1411 = vmatpush1.msra.mxu0 0.0
    %1412 = vmatprep.subr.mxu0 0.0
    %1413 = vmatpush1.msra.mxu0 0.0
    %1414 = vmatprep.subr.mxu0 0.0
    %1415 = vmatpush1.msra.mxu0 0.0
    %1416 = vmatprep.subr.mxu0 0.0
    %1417 = vmatpush1.msra.mxu0 0.0
    %1418 = vmatprep.subr.mxu0 0.0
    %1419 = vmatpush1.msra.mxu0 0.0
    %1420 = vmatprep.subr.mxu0 0.0
    %1421 = vmatpush1.msra.mxu0 0.0
    %1422 = vmatprep.mubr.f32.mxu0 0.0
    %1423 = vmatmul.mubr.f32.gmra.mrb[0].mxu0 %v1353
    %v1424 = vpop.f32.mrb[0].mxu0
    %v1425 = vadd.f32 %v1347, %v1424
    %v1426 = vpop.f32.mrb[0].mxu0
    %1427 = vmatprep.mubr.f32.mxu0 0.0
    %1428 = vmatmul.mubr.f32.gmra.mrb[0].mxu0 %v1356
    %v1429 = vpop.f32.mrb[0].mxu0
    %v1430 = vadd.f32 %v1349, %v1429
    %v1431 = vpop.f32.mrb[0].mxu0
    %1432 = vdwg.mxu0
    %1433 = vst.msk [vmem:[%s16] sm:$0xff] %vm499, %v1215
    %1434 = vst.msk [vmem:[%s16 + $0x8] sm:$0xff] %vm499, %v1220
    %1435 = vst.msk [vmem:[#allocation9] sm:$0xff] %vm499, %v1425
    %1436 = vst.msk [vmem:[#allocation9 + $0x8] sm:$0xff] %vm499, %v1430
    %1439 = vrot.lane.b32.xlu0 %v1215, 32
    %v1440 = vpop.permute.xlu0 %1439
    %1441 = vrot.lane.b32.xlu0 %v1220, 32
    %v1442 = vpop.permute.xlu0 %1441
    %v1445 = vsel %vm113, %v314, %v1440
    %v1446 = vsel %vm113, %v315, %v1442
    %vm1447 = vcmask 392192
    %1448 = vst.msk [vmem:[#allocation8] sm:$0xff] %vm1447, %v1445
    %1449 = vst.msk [vmem:[#allocation8 + $0x8] sm:$0xff] %vm1447, %v1446
    %v1450 = vld [vmem:[%s12] sm:$0xff]
    %v1451 = vld [vmem:[%s12 + $0x8] sm:$0xff]
    %v1452 = vld [vmem:[%s12 + $0x10] sm:$0xff]
    %v1453 = vld [vmem:[%s12 + $0x18] sm:$0xff]
    %v1454 = vld [vmem:[%s12 + $0x20] sm:$0xff]
    %v1455 = vld [vmem:[%s12 + $0x28] sm:$0xff]
    %v1456 = vld [vmem:[#allocation5] sm:$0x1]
    %v1458 = vlaneseq
    %v1459 = vshrl.u32 %v1458, 7
    %v1460 = vsub.s32 0, %v1459
    %v1461 = vrot.slane %v1456, %v1460
    %v1464 = vsel %vm1447, %v1445, 0
    %v1467 = vsel %vm1447, %v1446, 0
    %1469 = vmatprep.subr.mxu0 0.0
    %1470 = vmatpush1.msra.mxu0 %v1450
    %1471 = vmatprep.subr.mxu0 0.0
    %1472 = vmatpush1.msra.mxu0 %v1451
    %1473 = vmatprep.subr.mxu0 0.0
    %1474 = vmatpush1.msra.mxu0 %v1452
    %1475 = vmatprep.subr.mxu0 0.0
    %1476 = vmatpush1.msra.mxu0 %v1453
    %1477 = vmatprep.subr.mxu0 0.0
    %1478 = vmatpush1.msra.mxu0 %v1454
    %1479 = vmatprep.subr.mxu0 0.0
    %1480 = vmatpush1.msra.mxu0 %v1455
    %1481 = vmatprep.subr.mxu0 0.0
    %1482 = vmatpush1.msra.mxu0 0.0
    %1483 = vmatprep.subr.mxu0 0.0
    %1484 = vmatpush1.msra.mxu0 0.0
    %1485 = vmatprep.subr.mxu0 0.0
    %1486 = vmatpush1.msra.mxu0 0.0
    %1487 = vmatprep.subr.mxu0 0.0
    %1488 = vmatpush1.msra.mxu0 0.0
    %1489 = vmatprep.subr.mxu0 0.0
    %1490 = vmatpush1.msra.mxu0 0.0
    %1491 = vmatprep.subr.mxu0 0.0
    %1492 = vmatpush1.msra.mxu0 0.0
    %1493 = vmatprep.subr.mxu0 0.0
    %1494 = vmatpush1.msra.mxu0 0.0
    %1495 = vmatprep.subr.mxu0 0.0
    %1496 = vmatpush1.msra.mxu0 0.0
    %1497 = vmatprep.subr.mxu0 0.0
    %1498 = vmatpush1.msra.mxu0 0.0
    %1499 = vmatprep.subr.mxu0 0.0
    %1500 = vmatpush1.msra.mxu0 0.0
    %1501 = vmatprep.subr.mxu0 0.0
    %1502 = vmatpush1.msra.mxu0 0.0
    %1503 = vmatprep.subr.mxu0 0.0
    %1504 = vmatpush1.msra.mxu0 0.0
    %1505 = vmatprep.subr.mxu0 0.0
    %1506 = vmatpush1.msra.mxu0 0.0
    %1507 = vmatprep.subr.mxu0 0.0
    %1508 = vmatpush1.msra.mxu0 0.0
    %1509 = vmatprep.subr.mxu0 0.0
    %1510 = vmatpush1.msra.mxu0 0.0
    %1511 = vmatprep.subr.mxu0 0.0
    %1512 = vmatpush1.msra.mxu0 0.0
    %1513 = vmatprep.subr.mxu0 0.0
    %1514 = vmatpush1.msra.mxu0 0.0
    %1515 = vmatprep.subr.mxu0 0.0
    %1516 = vmatpush1.msra.mxu0 0.0
    %1517 = vmatprep.subr.mxu0 0.0
    %1518 = vmatpush1.msra.mxu0 0.0
    %1519 = vmatprep.subr.mxu0 0.0
    %1520 = vmatpush1.msra.mxu0 0.0
    %1521 = vmatprep.subr.mxu0 0.0
    %1522 = vmatpush1.msra.mxu0 0.0
    %1523 = vmatprep.subr.mxu0 0.0
    %1524 = vmatpush1.msra.mxu0 0.0
    %1525 = vmatprep.subr.mxu0 0.0
    %1526 = vmatpush1.msra.mxu0 0.0
    %1527 = vmatprep.subr.mxu0 0.0
    %1528 = vmatpush1.msra.mxu0 0.0
    %1529 = vmatprep.subr.mxu0 0.0
    %1530 = vmatpush1.msra.mxu0 0.0
    %1531 = vmatprep.subr.mxu0 0.0
    %1532 = vmatpush1.msra.mxu0 0.0
    %1533 = vmatprep.mubr.f32.mxu0 0.0
    %1534 = vmatmul.mubr.f32.gmra.mrb[0].mxu0 %v1464
    %v1535 = vpop.f32.mrb[0].mxu0
    %v1536 = vadd.f32 %v1461, %v1535
    %v1537 = vpop.f32.mrb[0].mxu0
    %1538 = vmatprep.mubr.f32.mxu0 0.0
    %1539 = vmatmul.mubr.f32.gmra.mrb[0].mxu0 %v1467
    %v1540 = vpop.f32.mrb[0].mxu0
    %v1541 = vadd.f32 %v1461, %v1540
    %v1542 = vpop.f32.mrb[0].mxu0
    %1543 = vdwg.mxu0
    %vm1544 = vcmp.gt.f32.partialorder %v1536, 0.0
    %vm1545 = vcmp.gt.f32.partialorder %v1541, 0.0
    %v1546 = vmin.f32 %v1536, 0.0
    %v1547 = vmin.f32 %v1541, 0.0
    %v1548 = vmul.f32 %v1546, 1.442695
    %v1549 = vpow.pop %v1548
    %v1550 = vmul.f32 %v1547, 1.442695
    %v1551 = vpow.pop %v1550
    %v1552 = vsub.f32 %v1549, 1.0
    %v1553 = vsub.f32 %v1551, 1.0
    %v1554 = vsel %vm1544, %v1536, %v1552
    %v1555 = vsel %vm1545, %v1541, %v1553
    %1556 = vst.msk [vmem:[#allocation11] sm:$0xff] %vm113, %v1554
    %1557 = vst.msk [vmem:[#allocation11 + $0x8] sm:$0xff] %vm113, %v1555
    %v1558 = vld [vmem:[#allocation7] sm:$0xff]
    %v1559 = vmul.f32 %v1445, %v1445
    %v1560 = vmul.f32 %v1446, %v1446
    %v1561 = vsel %vm1447, %v1559, 0.0
    %1562 = vadd.xlane.f32.xlu0 %v1561
    %v1563 = vpop.xlane.xlu0 %1562
    %v1564 = vsel %vm1447, %v1560, 0.0
    %1565 = vadd.xlane.f32.xlu0 %v1564
    %v1566 = vpop.xlane.xlu0 %1565
    %v1567 = vmul.f32 %v1558, %v1558
    %v1568 = vsel %vm1447, %v1567, 0.0
    %1569 = vadd.xlane.f32.xlu0 %v1568
    %v1570 = vpop.xlane.xlu0 %1569
    %1571 = vxpose.xlu0.b32.start [1/16] %v1570, 128
    %1572 = vxpose.xlu0.b32.cont [2/16] 0.0, 128
    %1573 = vxpose.xlu0.b32.cont [3/16] 0.0, 128
    %1574 = vxpose.xlu0.b32.cont [4/16] 0.0, 128
    %1575 = vxpose.xlu0.b32.cont [5/16] 0.0, 128
    %1576 = vxpose.xlu0.b32.cont [6/16] 0.0, 128
    %1577 = vxpose.xlu0.b32.cont [7/16] 0.0, 128
    %1578 = vxpose.xlu0.b32.cont [8/16] 0.0, 128
    %1579 = vxpose.xlu0.b32.cont [9/16] 0.0, 128
    %1580 = vxpose.xlu0.b32.cont [10/16] 0.0, 128
    %1581 = vxpose.xlu0.b32.cont [11/16] 0.0, 128
    %1582 = vxpose.xlu0.b32.cont [12/16] 0.0, 128
    %1583 = vxpose.xlu0.b32.cont [13/16] 0.0, 128
    %1584 = vxpose.xlu0.b32.cont [14/16] 0.0, 128
    %1585 = vxpose.xlu0.b32.cont [15/16] 0.0, 128
    %1586 = vxpose.xlu0.b32.end [16/16] 0.0, 128
    %v1587 = vpop.trf.xlu0
    %v1588 = vpop.trf.xlu0
    %v1589 = vpop.trf.xlu0
    %v1590 = vpop.trf.xlu0
    %v1591 = vpop.trf.xlu0
    %v1592 = vpop.trf.xlu0
    %v1593 = vpop.trf.xlu0
    %v1594 = vpop.trf.xlu0
    %v1595 = vpop.trf.xlu0
    %v1596 = vpop.trf.xlu0
    %v1597 = vpop.trf.xlu0
    %v1598 = vpop.trf.xlu0
    %v1599 = vpop.trf.xlu0
    %v1600 = vpop.trf.xlu0
    %v1601 = vpop.trf.xlu0
    %v1602 = vpop.trf.xlu0
    %v1603 = vlaneseq
    %v1604 = vshrl.u32 %v1603, 7
    %v1605 = vsub.s32 0, %v1604
    %v1606 = vrot.slane %v1587, %v1605
    %v1607 = vadd.f32 %v1563, %v1606
    %v1608 = vadd.f32 %v1566, %v1606
    %v1610 = vsel %vm1447, %v1558, 0
    %1612 = vmatprep.subr.mxu0 0.0
    %1613 = vmatpush1.xpose.msra.mxu0 %v1610
    %1614 = vmatprep.subr.mxu0 0.0
    %1615 = vmatpush1.xpose.msra.mxu0 0.0
    %1616 = vmatprep.subr.mxu0 0.0
    %1617 = vmatpush1.xpose.msra.mxu0 0.0
    %1618 = vmatprep.subr.mxu0 0.0
    %1619 = vmatpush1.xpose.msra.mxu0 0.0
    %1620 = vmatprep.subr.mxu0 0.0
    %1621 = vmatpush1.xpose.msra.mxu0 0.0
    %1622 = vmatprep.subr.mxu0 0.0
    %1623 = vmatpush1.xpose.msra.mxu0 0.0
    %1624 = vmatprep.subr.mxu0 0.0
    %1625 = vmatpush1.xpose.msra.mxu0 0.0
    %1626 = vmatprep.subr.mxu0 0.0
    %1627 = vmatpush1.xpose.msra.mxu0 0.0
    %1628 = vmatprep.subr.mxu0 0.0
    %1629 = vmatpush1.xpose.msra.mxu0 0.0
    %1630 = vmatprep.subr.mxu0 0.0
    %1631 = vmatpush1.xpose.msra.mxu0 0.0
    %1632 = vmatprep.subr.mxu0 0.0
    %1633 = vmatpush1.xpose.msra.mxu0 0.0
    %1634 = vmatprep.subr.mxu0 0.0
    %1635 = vmatpush1.xpose.msra.mxu0 0.0
    %1636 = vmatprep.subr.mxu0 0.0
    %1637 = vmatpush1.xpose.msra.mxu0 0.0
    %1638 = vmatprep.subr.mxu0 0.0
    %1639 = vmatpush1.xpose.msra.mxu0 0.0
    %1640 = vmatprep.subr.mxu0 0.0
    %1641 = vmatpush1.xpose.msra.mxu0 0.0
    %1642 = vmatprep.subr.mxu0 0.0
    %1643 = vmatpush1.xpose.msra.mxu0 0.0
    %1644 = vmatprep.subr.mxu0 0.0
    %1645 = vmatpush1.xpose.msra.mxu0 0.0
    %1646 = vmatprep.subr.mxu0 0.0
    %1647 = vmatpush1.xpose.msra.mxu0 0.0
    %1648 = vmatprep.subr.mxu0 0.0
    %1649 = vmatpush1.xpose.msra.mxu0 0.0
    %1650 = vmatprep.subr.mxu0 0.0
    %1651 = vmatpush1.xpose.msra.mxu0 0.0
    %1652 = vmatprep.subr.mxu0 0.0
    %1653 = vmatpush1.xpose.msra.mxu0 0.0
    %1654 = vmatprep.subr.mxu0 0.0
    %1655 = vmatpush1.xpose.msra.mxu0 0.0
    %1656 = vmatprep.subr.mxu0 0.0
    %1657 = vmatpush1.xpose.msra.mxu0 0.0
    %1658 = vmatprep.subr.mxu0 0.0
    %1659 = vmatpush1.xpose.msra.mxu0 0.0
    %1660 = vmatprep.subr.mxu0 0.0
    %1661 = vmatpush1.xpose.msra.mxu0 0.0
    %1662 = vmatprep.subr.mxu0 0.0
    %1663 = vmatpush1.xpose.msra.mxu0 0.0
    %1664 = vmatprep.subr.mxu0 0.0
    %1665 = vmatpush1.xpose.msra.mxu0 0.0
    %1666 = vmatprep.subr.mxu0 0.0
    %1667 = vmatpush1.xpose.msra.mxu0 0.0
    %1668 = vmatprep.subr.mxu0 0.0
    %1669 = vmatpush1.xpose.msra.mxu0 0.0
    %1670 = vmatprep.subr.mxu0 0.0
    %1671 = vmatpush1.xpose.msra.mxu0 0.0
    %1672 = vmatprep.subr.mxu0 0.0
    %1673 = vmatpush1.xpose.msra.mxu0 0.0
    %1674 = vmatprep.subr.mxu0 0.0
    %1675 = vmatpush1.xpose.msra.mxu0 0.0
    %1676 = vmatprep.mubr.f32.mxu0 0.0
    %1677 = vmatmul.mubr.f32.gmra.mrb[0].mxu0 %v1464
    %v1678 = vpop.f32.mrb[0].mxu0
    %v1679 = vadd.f32 0.0, %v1678
    %v1680 = vpop.f32.mrb[0].mxu0
    %1681 = vmatprep.mubr.f32.mxu0 0.0
    %1682 = vmatmul.mubr.f32.gmra.mrb[0].mxu0 %v1467
    %v1683 = vpop.f32.mrb[0].mxu0
    %v1684 = vadd.f32 0.0, %v1683
    %v1685 = vpop.f32.mrb[0].mxu0
    %1686 = vdwg.mxu0
    %v1687 = vmul.f32 %v1679, 2.0
    %v1688 = vmul.f32 %v1684, 2.0
    %v1689 = vsub.f32 %v1607, %v1687
    %v1690 = vsub.f32 %v1608, %v1688
    %v1691 = vmax.f32 %v1689, 0.0
    %v1692 = vmax.f32 %v1690, 0.0
    %v1693 = vadd.f32 %v1691, 1.0
    %v1694 = vadd.f32 %v1692, 1.0
    %v1695 = vrcp.pop %v1693
    %v1696 = vmul.f32 1.0, %v1695
    %v1697 = vrcp.pop %v1694
    %v1698 = vmul.f32 1.0, %v1697
    %vm1699 = vcmask 64512
    %v1700 = vsel %vm1699, %v1696, 0.0
    %1701 = vadd.xlane.f32.xlu0 %v1700
    %v1702 = vpop.xlane.xlu0 %1701
    %v1703 = vsel %vm1699, %v1698, 0.0
    %1704 = vadd.xlane.f32.xlu0 %v1703
    %v1705 = vpop.xlane.xlu0 %1704
    %v1706 = vrcp.pop %v1702
    %v1707 = vmul.f32 %v1696, %v1706
    %v1708 = vrcp.pop %v1705
    %v1709 = vmul.f32 %v1698, %v1708
    %1710 = vst.msk [vmem:[%s19] sm:$0xff] %vm1699, %v1707
    %1711 = vst.msk [vmem:[%s19 + $0x8] sm:$0xff] %vm1699, %v1709
    // Predicated region
    $region74: #{st_transformer_forward.1} parent=1 // pred_check
      _
    $region75: #{st_transformer_forward.1} parent=1 // pred_check_branch
      %1713 = sbr.rel (0) target = $region77
    $region76: #{st_transformer_forward.1} parent=1 // pred_region
      %s1715 = ssub.s32 256, 256
      %1716 = vsyncadd [#allocation4], %s1715
      %s1717 = sshll.u32 [#allocation8], 4
      %s1718 = int_to_ptr.vmem [resolvable:$true] %s1717
      %1723 = dma.vmem_to_hbm [thread:$0]  %s1718, 256, %s15, [#allocation4], 128, 128, 8
    $region77: #{st_transformer_forward.1} parent=1 // pred_fallthru
      _
    // Predicated region
    $region78: #{st_transformer_forward.1} parent=1 // pred_check
      _
    $region79: #{st_transformer_forward.1} parent=1 // pred_check_branch
      %1725 = sbr.rel (0) target = $region81
    $region80: #{st_transformer_forward.1} parent=1 // pred_region
      _
    $region81: #{st_transformer_forward.1} parent=1 // pred_fallthru
      _
    // Predicated region
    $region82: #{st_transformer_forward.1} parent=1 // pred_check
      _
    $region83: #{st_transformer_forward.1} parent=1 // pred_check_branch
      %1727 = sbr.rel (0) target = $region85
    $region84: #{st_transformer_forward.1} parent=1 // pred_region
      %s1729 = ssub.s32 256, 256
      %1730 = vsyncadd [#allocation10], %s1729
      %s1731 = sshll.u32 [#allocation9], 4
      %s1732 = int_to_ptr.vmem [resolvable:$true] %s1731
      %1737 = dma.vmem_to_hbm [thread:$0]  %s1732, 256, %s17, [#allocation10], 128, 128, 8
    $region85: #{st_transformer_forward.1} parent=1 // pred_fallthru
      _
    // Predicated region
    $region86: #{st_transformer_forward.1} parent=1 // pred_check
      _
    $region87: #{st_transformer_forward.1} parent=1 // pred_check_branch
      %1739 = sbr.rel (0) target = $region89
    $region88: #{st_transformer_forward.1} parent=1 // pred_region
      %s1741 = ssub.s32 256, 256
      %1742 = vsyncadd [#allocation10], %s1741
      %s1743 = sshll.u32 [#allocation11], 4
      %s1744 = int_to_ptr.vmem [resolvable:$true] %s1743
      %1749 = dma.vmem_to_hbm [thread:$0]  %s1744, 256, %s18, [#allocation10], 128, 128, 8
    $region89: #{st_transformer_forward.1} parent=1 // pred_fallthru
      _
    // Predicated region
    $region90: #{st_transformer_forward.1} parent=1 // pred_check
      _
    $region91: #{st_transformer_forward.1} parent=1 // pred_check_branch
      %1751 = sbr.rel (0) target = $region93
    $region92: #{st_transformer_forward.1} parent=1 // pred_region
      _
    $region93: #{st_transformer_forward.1} parent=1 // pred_fallthru
      _
    // Predicated region
    $region94: #{st_transformer_forward.1} parent=1 // pred_check
      _
    $region95: #{st_transformer_forward.1} parent=1 // pred_check_branch
      %1753 = sbr.rel (0) target = $region97
    $region96: #{st_transformer_forward.1} parent=1 // pred_region
      %s1755 = ssub.s32 256, 256
      %1756 = vsyncadd [#allocation13], %s1755
      %s1757 = sshll.u32 [#allocation12], 4
      %s1758 = int_to_ptr.vmem [resolvable:$true] %s1757
      %1763 = dma.vmem_to_hbm [thread:$0]  %s1758, 256, %s20, [#allocation13], 128, 128, 8
    $region97: #{st_transformer_forward.1} parent=1 // pred_fallthru
      _
    // Predicated region
    $region98: #{st_transformer_forward.1} parent=1 // pred_check
      _
    $region99: #{st_transformer_forward.1} parent=1 // pred_check_branch
      %1765 = sbr.rel (0) target = $region101
    $region100: #{st_transformer_forward.1} parent=1 // pred_region
      %1766 = dma.done [#allocation4], 256
    $region101: #{st_transformer_forward.1} parent=1 // pred_fallthru
      _
    // Predicated region
    $region102: #{st_transformer_forward.1} parent=1 // pred_check
      _
    $region103: #{st_transformer_forward.1} parent=1 // pred_check_branch
      %1768 = sbr.rel (0) target = $region105
    $region104: #{st_transformer_forward.1} parent=1 // pred_region
      _
    $region105: #{st_transformer_forward.1} parent=1 // pred_fallthru
      _
    // Predicated region
    $region106: #{st_transformer_forward.1} parent=1 // pred_check
      _
    $region107: #{st_transformer_forward.1} parent=1 // pred_check_branch
      %1770 = sbr.rel (0) target = $region109
    $region108: #{st_transformer_forward.1} parent=1 // pred_region
      %1771 = dma.done [#allocation10], 256
    $region109: #{st_transformer_forward.1} parent=1 // pred_fallthru
      _
    // Predicated region
    $region110: #{st_transformer_forward.1} parent=1 // pred_check
      _
    $region111: #{st_transformer_forward.1} parent=1 // pred_check_branch
      %1773 = sbr.rel (0) target = $region113
    $region112: #{st_transformer_forward.1} parent=1 // pred_region
      %1774 = dma.done [#allocation10], 256
    $region113: #{st_transformer_forward.1} parent=1 // pred_fallthru
      _
    // Predicated region
    $region114: #{st_transformer_forward.1} parent=1 // pred_check
      _
    $region115: #{st_transformer_forward.1} parent=1 // pred_check_branch
      %1776 = sbr.rel (0) target = $region117
    $region116: #{st_transformer_forward.1} parent=1 // pred_region
      _
    $region117: #{st_transformer_forward.1} parent=1 // pred_fallthru
      _
    // Predicated region
    $region118: #{st_transformer_forward.1} parent=1 // pred_check
      _
    $region119: #{st_transformer_forward.1} parent=1 // pred_check_branch
      %1778 = sbr.rel (0) target = $region121
    $region120: #{st_transformer_forward.1} parent=1 // pred_region
      %1779 = dma.done [#allocation13], 256
    $region121: #{st_transformer_forward.1} parent=1 // pred_fallthru
      _
    %1780 = vsyncpa [#allocation3], 1
    %1781 = vsyncpa [#allocation6], 1
    %1782 = vsyncpa [#allocation4], 1
    %1783 = vsyncpa [#allocation10], 1
    %1784 = vsyncpa [#allocation13], 1

</llo_original>
